<compile_context>
chip_gen: v7x
topology: tpu7x:2x2x1
jax: 0.10.0
libtpu: 0.0.40
codegen_flags: <defaults>
</compile_context>

<pallas_src>
import functools

import jax
import jax.numpy as jnp
from jax.experimental import pallas as pl
from jax.experimental.pallas import tpu as pltpu

EPS = 1e-5                      # torch.nn.LayerNorm default
NEG_BIG = -1e30                 # large finite negative; exp() underflows to 0 safely
VMEM_LIMIT = 64 * 1024 * 1024   # raise the scoped-VMEM default (esp. v5e's 16 MiB)


# ------------------------------ shared helpers -------------------------------

def _mxu_dot(a_f32, w_bf16):
    """MXU matmul: activation cast to bf16 here, weight already stored in bf16."""
    return jnp.dot(a_f32.astype(jnp.bfloat16), w_bf16,
                   preferred_element_type=jnp.float32)


def _layernorm(x, g, b):
    """x: (M, D) f32; g, b: (1, D). One-pass mean/var (single reduction sweep)."""
    mean = jnp.mean(x, axis=-1, keepdims=True)
    ex2 = jnp.mean(x * x, axis=-1, keepdims=True)
    var = jnp.maximum(ex2 - mean * mean, 0.0)
    return (x - mean) * jax.lax.rsqrt(var + EPS) * g + b


def _mha_body(q, k, v, mask, num_heads, head_dim):
    """q: (T, D), k/v: (S, D), mask: (T, S) additive or None -> ctx (T, D).

    Heads stay packed along the channel axis; per-head work is a short,
    statically-unrolled loop of small 2-D matmuls inside one kernel.
    TODO(synk): at BART scale (D=1024, hd=64, long T/S) replace this with a
    head-batched dot_general / flash-style query tiling so only one (tq, S)
    score tile is live and the 256-wide MXU is better filled.
    """
    ctx_heads = []
    for h in range(num_heads):
        lo = h * head_dim
        qh = q[:, lo:lo + head_dim]
        kh = k[:, lo:lo + head_dim]
        vh = v[:, lo:lo + head_dim]
        s = jax.lax.dot_general(
            qh.astype(jnp.bfloat16), kh.astype(jnp.bfloat16),
            dimension_numbers=(((1,), (1,)), ((), ())),
            preferred_element_type=jnp.float32)                 # (T, S)
        if mask is not None:
            s = s + mask
        s = s - jnp.max(s, axis=-1, keepdims=True)              # stable softmax
        p = jnp.exp(s)
        denom = jnp.maximum(jnp.sum(p, axis=-1, keepdims=True), 1e-30)  # masked-row guard
        p = p * pl.reciprocal(denom, approx=True)
        ctx_heads.append(jnp.dot(p.astype(jnp.bfloat16), vh.astype(jnp.bfloat16),
                                 preferred_element_type=jnp.float32))   # (T, hd)
    return jnp.concatenate(ctx_heads, axis=-1)                  # (T, D)


# ------------------------------- Pallas kernels -------------------------------

def _self_attn_kernel(x_ref, wqkv_ref, bqkv_ref, wo_ref, bo_ref,
                      g_ref, beta_ref,
                      o_ref, kc_ref, vc_ref, *, num_heads):
    """Fused self-attention + residual + post-LayerNorm for one batch element."""
    x = x_ref[0].astype(jnp.float32)                            # (T, D)
    T, D = x.shape
    hd = D // num_heads

    qkv = _mxu_dot(x, wqkv_ref[...]) + bqkv_ref[...]            # (T, 3D), q pre-scaled
    q = qkv[:, :D]
    k = qkv[:, D:2 * D]
    v = qkv[:, 2 * D:]
    kc_ref[0] = k.astype(kc_ref.dtype)                          # kv-cache (unscaled)
    vc_ref[0] = v.astype(vc_ref.dtype)

    # causal mask generated in-kernel: no (T,T) HBM DMA, no extra VMEM buffer.
    rows = jax.lax.broadcasted_iota(jnp.int32, (T, T), 0)
    cols = jax.lax.broadcasted_iota(jnp.int32, (T, T), 1)
    mask = jnp.where(cols > rows, NEG_BIG, 0.0).astype(jnp.float32)
    # TODO(synk): boolean decoder_padding_mask (None in this setup) not implemented.

    ctx = _mha_body(q, k, v, mask, num_heads, hd)               # (T, D)
    attn_out = _mxu_dot(ctx, wo_ref[...]) + bo_ref[...]

    y = x + attn_out                                            # residual
    o_ref[0] = _layernorm(y, g_ref[...], beta_ref[...]).astype(o_ref.dtype)


def _cross_attn_kernel(xq_ref, enc_ref, wq_ref, bq_ref, wkv_ref, bkv_ref,
                       wo_ref, bo_ref,
                       o_ref, kc_ref, vc_ref, *, num_heads):
    """Fused encoder-decoder attention + residual (LN2 folded into the FFN)."""
    xq = xq_ref[0].astype(jnp.float32)                          # (T, D)
    enc = enc_ref[0].astype(jnp.float32)                        # (S, D)
    D = xq.shape[-1]
    hd = D // num_heads

    q = _mxu_dot(xq, wq_ref[...]) + bq_ref[...]                 # pre-scaled
    kv = _mxu_dot(enc, wkv_ref[...]) + bkv_ref[...]             # (S, 2D)
    k = kv[:, :D]
    v = kv[:, D:]
    kc_ref[0] = k.astype(kc_ref.dtype)
    vc_ref[0] = v.astype(vc_ref.dtype)

    # TODO(synk): boolean encoder_attn_mask (None in this setup) not implemented.
    ctx = _mha_body(q, k, v, None, num_heads, hd)               # no mask DMA
    attn_out = _mxu_dot(ctx, wo_ref[...]) + bo_ref[...]
    o_ref[0] = (xq + attn_out).astype(o_ref.dtype)              # residual only


def _ffn_kernel(y_ref, w1_ref, b1_ref, w2_ref, b2_ref, g_ref, beta_ref, o_ref):
    """LN2 stats (of the duplicated concat) + effective fc1 + gelu + fc2 + final LN."""
    y = y_ref[...].astype(jnp.float32)                          # (tm, D)
    mean = jnp.mean(y, axis=-1, keepdims=True)
    ex2 = jnp.mean(y * y, axis=-1, keepdims=True)
    var = jnp.maximum(ex2 - mean * mean, 0.0)
    yn = (y - mean) * jax.lax.rsqrt(var + EPS)                  # gains folded into w1

    h = _mxu_dot(yn, w1_ref[...]) + b1_ref[...]                 # (tm, FFN)
    h = jax.nn.gelu(h, approximate=False)                       # exact erf gelu
    out = _mxu_dot(h, w2_ref[...]) + b2_ref[...]                # (tm, D)

    o_ref[...] = _layernorm(out, g_ref[...], beta_ref[...]).astype(o_ref.dtype)


# --------------------------------- wrappers -----------------------------------
# NOTE: weight/bias BlockSpecs have constant index_maps; they are still
# double-buffered by default.  TODO(synk): mark them pipeline_mode=pl.Buffered(1)
# (single-buffer) at BART scale to halve their resident VMEM.

def self_attention_block(x_btd, p, num_heads):
    """x_btd: (B, T, D). Returns (LN(x+attn), k_cache, v_cache), all (B, T, D)."""
    B, T, D = x_btd.shape
    kern = functools.partial(_self_attn_kernel, num_heads=num_heads)
    return pl.pallas_call(
        kern,
        grid=(B,),
        in_specs=[
            pl.BlockSpec((1, T, D), lambda b: (b, 0, 0)),
            pl.BlockSpec((D, 3 * D), lambda b: (0, 0)),
            pl.BlockSpec((1, 3 * D), lambda b: (0, 0)),
            pl.BlockSpec((D, D), lambda b: (0, 0)),
            pl.BlockSpec((1, D), lambda b: (0, 0)),
            pl.BlockSpec((1, D), lambda b: (0, 0)),
            pl.BlockSpec((1, D), lambda b: (0, 0)),
        ],
        out_specs=[
            pl.BlockSpec((1, T, D), lambda b: (b, 0, 0)),
            pl.BlockSpec((1, T, D), lambda b: (b, 0, 0)),
            pl.BlockSpec((1, T, D), lambda b: (b, 0, 0)),
        ],
        out_shape=[
            jax.ShapeDtypeStruct((B, T, D), x_btd.dtype),
            jax.ShapeDtypeStruct((B, T, D), x_btd.dtype),
            jax.ShapeDtypeStruct((B, T, D), x_btd.dtype),
        ],
        compiler_params=pltpu.CompilerParams(
            dimension_semantics=("parallel",),
            vmem_limit_bytes=VMEM_LIMIT),
    )(x_btd, p["wqkv"], p["bqkv"], p["wo"], p["bo"], p["ln_g"], p["ln_b"])


def cross_attention_block(xq_btd, enc_btd, p, num_heads):
    """xq_btd: (B, T, D), enc_btd: (B, S, D). Returns (x+attn, k_cache, v_cache)."""
    B, T, D = xq_btd.shape
    S = enc_btd.shape[1]
    kern = functools.partial(_cross_attn_kernel, num_heads=num_heads)
    return pl.pallas_call(
        kern,
        grid=(B,),
        in_specs=[
            pl.BlockSpec((1, T, D), lambda b: (b, 0, 0)),
            pl.BlockSpec((1, S, D), lambda b: (b, 0, 0)),
            pl.BlockSpec((D, D), lambda b: (0, 0)),
            pl.BlockSpec((1, D), lambda b: (0, 0)),
            pl.BlockSpec((D, 2 * D), lambda b: (0, 0)),
            pl.BlockSpec((1, 2 * D), lambda b: (0, 0)),
            pl.BlockSpec((D, D), lambda b: (0, 0)),
            pl.BlockSpec((1, D), lambda b: (0, 0)),
        ],
        out_specs=[
            pl.BlockSpec((1, T, D), lambda b: (b, 0, 0)),
            pl.BlockSpec((1, S, D), lambda b: (b, 0, 0)),
            pl.BlockSpec((1, S, D), lambda b: (b, 0, 0)),
        ],
        out_shape=[
            jax.ShapeDtypeStruct((B, T, D), xq_btd.dtype),
            jax.ShapeDtypeStruct((B, S, D), xq_btd.dtype),
            jax.ShapeDtypeStruct((B, S, D), xq_btd.dtype),
        ],
        compiler_params=pltpu.CompilerParams(
            dimension_semantics=("parallel",),
            vmem_limit_bytes=VMEM_LIMIT),
    )(xq_btd, enc_btd, p["wq"], p["bq"], p["wkv"], p["bkv"], p["wo"], p["bo"])


def _row_tile(m, cap=256):
    """Largest divisor of m that is a multiple of 8 and <= cap, else full m."""
    for d in range(min(m, cap), 7, -1):
        if m % d == 0 and d % 8 == 0:
            return d
    return m


def ffn_block(y2d, p):
    """y2d: (M, D) -> (M, D), rows tiled over a parallel grid."""
    M, D = y2d.shape
    ffn_dim = p["w1_eff"].shape[1]
    tm = _row_tile(M)
    # TODO(synk): at BART scale (D=1024, FFN=4096) additionally tile the FFN
    # dimension with an f32 accumulator (or emit_pipeline) so the full bf16
    # (D,FFN)/(FFN,D) weights are never simultaneously resident in VMEM.
    return pl.pallas_call(
        _ffn_kernel,
        grid=(M // tm,),
        in_specs=[
            pl.BlockSpec((tm, D), lambda i: (i, 0)),
            pl.BlockSpec((D, ffn_dim), lambda i: (0, 0)),
            pl.BlockSpec((1, ffn_dim), lambda i: (0, 0)),
            pl.BlockSpec((ffn_dim, D), lambda i: (0, 0)),
            pl.BlockSpec((1, D), lambda i: (0, 0)),
            pl.BlockSpec((1, D), lambda i: (0, 0)),
            pl.BlockSpec((1, D), lambda i: (0, 0)),
        ],
        out_specs=pl.BlockSpec((tm, D), lambda i: (i, 0)),
        out_shape=jax.ShapeDtypeStruct((M, D), y2d.dtype),
        compiler_params=pltpu.CompilerParams(
            dimension_semantics=("parallel",),
            vmem_limit_bytes=VMEM_LIMIT),
    )(y2d, p["w1_eff"], p["b1_eff"], p["w2"], p["b2"], p["final_g"], p["final_b"])


# ----------------------------- DecoderLayer forward ---------------------------

def decoder_layer_forward(fused, x, encoder_hidden_states, num_heads):
    """normalize_before=False (post-norm), eval mode (dropout = identity).

    The standard additive causal mask is generated in-kernel.
    TODO(synk): arbitrary attn_mask tensors and boolean key_padding_masks
    (decoder_padding_mask / encoder_attn_mask) are None in this setup and not
    implemented in-kernel.
    """
    T, B, D = x.shape
    S = encoder_hidden_states.shape[0]
    hd = D // num_heads

    # one-time relayout to batch-major so every kernel tile is lane-dense (.., D);
    # a direct (T, 1, D) block over the (T, B, D) layout would violate the (8,128)
    # second-minor block constraint.
    x_btd = jnp.transpose(x, (1, 0, 2))                                 # (B, T, D)
    enc_btd = jnp.transpose(encoder_hidden_states, (1, 0, 2))           # (B, S, D)

    # ---- fused self-attention + residual + LayerNorm ----
    M_btd, k_self, v_self = self_attention_block(x_btd, fused["self_attn"], num_heads)

    # ---- fused cross-attention + residual (module calls it twice with identical
    # inputs/weights and no dropout at eval -> identical outputs; compute once) ----
    y_btd, k_cross, v_cross = cross_attention_block(
        M_btd, enc_btd, fused["cross_attn"], num_heads)

    # ---- fused LN2 (of [y, y]) + effective fc1 + gelu + fc2 + final LayerNorm ----
    out_btd = ffn_block(y_btd.reshape(B * T, D), fused["ffn"]).reshape(B, T, D)

    # back to module layout (T, B, D)
    decoder_inputs = jnp.transpose(out_btd, (1, 0, 2))
    decoder_inputs_query = jnp.transpose(y_btd, (1, 0, 2))
    decoder_inputs_content = decoder_inputs_query       # identical at eval (no dropout)
    decoder_inputs_M = jnp.transpose(M_btd, (1, 0, 2))

    def to_cache(k_bsd, v_bsd, s):
        return dict(
            prev_key=k_bsd.reshape(B, s, num_heads, hd).transpose(0, 2, 1, 3),
            prev_value=v_bsd.reshape(B, s, num_heads, hd).transpose(0, 2, 1, 3))

    layer_state = {"self": to_cache(k_self, v_self, T),
                   "encoder_decoder": to_cache(k_cross, v_cross, S)}

    return (decoder_inputs, decoder_inputs_query, decoder_inputs_content,
            decoder_inputs_M, layer_state)


# ------------------------------- Param handling --------------------------------

def init_attention_params(key, d):
    ks = jax.random.split(key, 4)

    def w(k):  # stored as (in, out) == torch weight.T
        return jax.random.normal(k, (d, d), jnp.float32) * 0.02

    return {
        "wq": w(ks[0]), "bq": jnp.zeros((1, d), jnp.float32),
        "wk": w(ks[1]), "bk": jnp.zeros((1, d), jnp.float32),
        "wv": w(ks[2]), "bv": jnp.zeros((1, d), jnp.float32),
        "wo": w(ks[3]), "bo": jnp.zeros((1, d), jnp.float32),
    }


def init_decoder_layer_params(key, d, ffn):
    ks = jax.random.split(key, 4)
    return {
        "self_attn": init_attention_params(ks[0], d),
        "encoder_attn": init_attention_params(ks[1], d),
        "self_attn_ln_g": jnp.ones((1, d), jnp.float32),
        "self_attn_ln_b": jnp.zeros((1, d), jnp.float32),
        "enc_attn_ln2_g": jnp.ones((1, 2 * d), jnp.float32),
        "enc_attn_ln2_b": jnp.zeros((1, 2 * d), jnp.float32),
        "final_ln_g": jnp.ones((1, d), jnp.float32),
        "final_ln_b": jnp.zeros((1, d), jnp.float32),
        "fc1_w": jax.random.normal(ks[2], (2 * d, ffn), jnp.float32) * 0.02,
        "fc1_b": jnp.zeros((1, ffn), jnp.float32),
        "fc2_w": jax.random.normal(ks[3], (ffn, d), jnp.float32) * 0.02,
        "fc2_b": jnp.zeros((1, d), jnp.float32),
    }


def prepare_fused_params(raw, d, num_heads):
    """One-time weight fusion / constant folding (math-preserving):
       - q-scale folded into wq/bq,
       - wq/wk/wv fused to one (D,3D) matmul (self) and wk/wv to (D,2D) (cross),
       - LN2 gains/bias and the duplicated [y,y] concat folded into an effective
         (D, FFN) fc1 weight (halves fc1 FLOPs),
       - all matmul weights pre-cast to bf16 ONCE here (MXU consumes bf16 anyway);
         biases / LayerNorm affine params stay f32.
       TODO(synk): on v7x, optionally quantize these weights to fp8 with folded
       per-channel scales for another 2x on weight DMA / MXU rate."""
    hd = d // num_heads
    scaling = hd ** (-0.5)

    sa = raw["self_attn"]
    self_attn = {
        "wqkv": jnp.concatenate([sa["wq"] * scaling, sa["wk"], sa["wv"]],
                                axis=1).astype(jnp.bfloat16),
        "bqkv": jnp.concatenate([sa["bq"] * scaling, sa["bk"], sa["bv"]], axis=1),
        "wo": sa["wo"].astype(jnp.bfloat16), "bo": sa["bo"],
        "ln_g": raw["self_attn_ln_g"], "ln_b": raw["self_attn_ln_b"],
    }

    ea = raw["encoder_attn"]
    cross_attn = {
        "wq": (ea["wq"] * scaling).astype(jnp.bfloat16), "bq": ea["bq"] * scaling,
        "wkv": jnp.concatenate([ea["wk"], ea["wv"]], axis=1).astype(jnp.bfloat16),
        "bkv": jnp.concatenate([ea["bk"], ea["bv"]], axis=1),
        "wo": ea["wo"].astype(jnp.bfloat16), "bo": ea["bo"],
    }

    # LN2 over concat([y, y]) has the same mean/var as LN over y; fold the per-half
    # gains/biases into fc1:  fc1(LN2([y,y])) == yn @ W_eff + b_eff  with yn = (y-m)/s.
    g = raw["enc_attn_ln2_g"][0]
    be = raw["enc_attn_ln2_b"][0]
    g1, g2 = g[:d], g[d:]
    b1, b2 = be[:d], be[d:]
    w_top, w_bot = raw["fc1_w"][:d], raw["fc1_w"][d:]
    w1_eff = g1[:, None] * w_top + g2[:, None] * w_bot                   # (D, FFN)
    b1_eff = (b1 @ w_top + b2 @ w_bot)[None, :] + raw["fc1_b"]           # (1, FFN)

    ffn = {
        "w1_eff": w1_eff.astype(jnp.bfloat16), "b1_eff": b1_eff,
        "w2": raw["fc2_w"].astype(jnp.bfloat16), "b2": raw["fc2_b"],
        "final_g": raw["final_ln_g"], "final_b": raw["final_ln_b"],
    }
    return {"self_attn": self_attn, "cross_attn": cross_attn, "ffn": ffn}


# ------------------------------------ main -------------------------------------

if __name__ == "__main__":
    # NOTE: toy shapes for the self-contained smoke test only; tiling/perf should
    # be validated at BART scale (D=1024, FFN=4096, realistic T/S).
    T, B, D, H, FFN, S = 8, 2, 32, 4, 64, 8   # tgt_len, batch, d_model, heads, ffn, src_len

    key = jax.random.PRNGKey(0)
    k_x, k_enc, k_p = jax.random.split(key, 3)

    x = jax.random.normal(k_x, (T, B, D), jnp.float32)                   # (T, B, D)
    encoder_hidden_states = jax.random.normal(k_enc, (S, B, D), jnp.float32)

    raw_params = init_decoder_layer_params(k_p, D, FFN)
    fused_params = prepare_fused_params(raw_params, D, H)

    outs = decoder_layer_forward(fused_params, x, encoder_hidden_states, H)
    (decoder_inputs, dec_q, dec_c, dec_M, layer_state) = outs

    jax.block_until_ready(decoder_inputs)
    jax.block_until_ready(dec_q)
    jax.block_until_ready(dec_c)
    jax.block_until_ready(dec_M)
    jax.block_until_ready(layer_state["self"]["prev_key"])
    jax.block_until_ready(layer_state["encoder_decoder"]["prev_value"])

    assert decoder_inputs.shape == (T, B, D)
    assert dec_q.shape == (T, B, D) and dec_c.shape == (T, B, D) and dec_M.shape == (T, B, D)
    assert layer_state["self"]["prev_key"].shape == (B, H, T, D // H)
    assert layer_state["encoder_decoder"]["prev_value"].shape == (B, H, S, D // H)
    assert bool(jnp.all(jnp.isfinite(decoder_inputs)))
    print("KERNEL_OK")
</pallas_src>

<mosaic_0001>
module attributes {stable_mosaic.version = 11 : i64} {
  func.func @_self_attn_kernel(%arg0: i32, %arg1: memref<1x8x32xf32, #tpu.memory_space<vmem>>, %arg2: memref<32x96xbf16, #tpu.memory_space<vmem>>, %arg3: memref<1x96xf32, #tpu.memory_space<vmem>>, %arg4: memref<32x32xbf16, #tpu.memory_space<vmem>>, %arg5: memref<1x32xf32, #tpu.memory_space<vmem>>, %arg6: memref<1x32xf32, #tpu.memory_space<vmem>>, %arg7: memref<1x32xf32, #tpu.memory_space<vmem>>, %arg8: memref<1x8x32xf32, #tpu.memory_space<vmem>>, %arg9: memref<1x8x32xf32, #tpu.memory_space<vmem>>, %arg10: memref<1x8x32xf32, #tpu.memory_space<vmem>>) attributes {dimension_semantics = [#tpu.dimension_semantics<parallel>], iteration_bounds = array<i64: 2>, scalar_prefetch = 0 : i64, scratch_operands = 0 : i64, tpu.core_type = #tpu.core_type<tc>, window_params = [{transform_indices = @transform_0, window_bounds = array<i64: 1, 8, 32>}, {pipeline_mode = #tpu.pipeline_mode<synchronous>, transform_indices = @transform_1, window_bounds = array<i64: 32, 96>}, {pipeline_mode = #tpu.pipeline_mode<synchronous>, transform_indices = @transform_2, window_bounds = array<i64: 1, 96>}, {pipeline_mode = #tpu.pipeline_mode<synchronous>, transform_indices = @transform_3, window_bounds = array<i64: 32, 32>}, {pipeline_mode = #tpu.pipeline_mode<synchronous>, transform_indices = @transform_4, window_bounds = array<i64: 1, 32>}, {pipeline_mode = #tpu.pipeline_mode<synchronous>, transform_indices = @transform_5, window_bounds = array<i64: 1, 32>}, {pipeline_mode = #tpu.pipeline_mode<synchronous>, transform_indices = @transform_6, window_bounds = array<i64: 1, 32>}, {transform_indices = @transform_7, window_bounds = array<i64: 1, 8, 32>}, {transform_indices = @transform_8, window_bounds = array<i64: 1, 8, 32>}, {transform_indices = @transform_9, window_bounds = array<i64: 1, 8, 32>}]} {
    %c0 = arith.constant 0 : index
    %c0_0 = arith.constant 0 : index
    %c0_1 = arith.constant 0 : index
    %0 = vector.load %arg1[%c0, %c0_0, %c0_1] : memref<1x8x32xf32, #tpu.memory_space<vmem>>, vector<1x8x32xf32>
    %1 = vector.shape_cast %0 : vector<1x8x32xf32> to vector<8x32xf32>
    %c0_2 = arith.constant 0 : index
    %c0_3 = arith.constant 0 : index
    %2 = vector.load %arg2[%c0_2, %c0_3] : memref<32x96xbf16, #tpu.memory_space<vmem>>, vector<32x96xbf16>
    %3 = arith.truncf %1 : vector<8x32xf32> to vector<8x32xbf16>
    %cst = arith.constant dense<0.000000e+00> : vector<8x96xf32>
    %4 = tpu.matmul %3, %2, %cst {dimension_numbers = #tpu.dot_dimension_numbers<[1], [0], [0], [1], [0, 0, 1, 1], [], []>} : vector<8x32xbf16>, vector<32x96xbf16>, vector<8x96xf32> -> vector<8x96xf32>
    %c0_4 = arith.constant 0 : index
    %c0_5 = arith.constant 0 : index
    %5 = vector.load %arg3[%c0_4, %c0_5] : memref<1x96xf32, #tpu.memory_space<vmem>>, vector<1x96xf32>
    %6 = vector.broadcast %5 : vector<1x96xf32> to vector<8x96xf32>
    %7 = arith.addf %4, %6 : vector<8x96xf32>
    %8 = vector.extract_strided_slice %7 {offsets = [0, 0], sizes = [8, 32], strides = [1, 1]} : vector<8x96xf32> to vector<8x32xf32>
    %9 = vector.extract_strided_slice %7 {offsets = [0, 32], sizes = [8, 32], strides = [1, 1]} : vector<8x96xf32> to vector<8x32xf32>
    %10 = vector.extract_strided_slice %7 {offsets = [0, 64], sizes = [8, 32], strides = [1, 1]} : vector<8x96xf32> to vector<8x32xf32>
    %c0_6 = arith.constant 0 : index
    %c0_7 = arith.constant 0 : index
    %c0_8 = arith.constant 0 : index
    %11 = vector.load %arg9[%c0_6, %c0_7, %c0_8] : memref<1x8x32xf32, #tpu.memory_space<vmem>>, vector<1x8x32xf32>
    %12 = vector.shape_cast %11 : vector<1x8x32xf32> to vector<8x32xf32>
    %13 = vector.shape_cast %9 : vector<8x32xf32> to vector<1x8x32xf32>
    tpu.vector_store %arg9[%c0_6, %c0_7, %c0_8], %13 {strides = array<i32>} : memref<1x8x32xf32, #tpu.memory_space<vmem>>, vector<1x8x32xf32>,
    %c0_9 = arith.constant 0 : index
    %c0_10 = arith.constant 0 : index
    %c0_11 = arith.constant 0 : index
    %14 = vector.load %arg10[%c0_9, %c0_10, %c0_11] : memref<1x8x32xf32, #tpu.memory_space<vmem>>, vector<1x8x32xf32>
    %15 = vector.shape_cast %14 : vector<1x8x32xf32> to vector<8x32xf32>
    %16 = vector.shape_cast %10 : vector<8x32xf32> to vector<1x8x32xf32>
    tpu.vector_store %arg10[%c0_9, %c0_10, %c0_11], %16 {strides = array<i32>} : memref<1x8x32xf32, #tpu.memory_space<vmem>>, vector<1x8x32xf32>,
    %17 = tpu.iota {dimensions = array<i32: 0>} : vector<8x8xi32>
    %18 = tpu.iota {dimensions = array<i32: 1>} : vector<8x8xi32>
    %19 = arith.cmpi sgt, %18, %17 : vector<8x8xi32>
    %cst_12 = arith.constant -1.000000e+30 : f32
    %cst_13 = arith.constant 0.000000e+00 : f32
    %20 = vector.broadcast %cst_12 : f32 to vector<8x8xf32>
    %21 = vector.broadcast %cst_13 : f32 to vector<8x8xf32>
    %22 = arith.select %19, %20, %21 : vector<8x8xi1>, vector<8x8xf32>
    %23 = vector.extract_strided_slice %8 {offsets = [0, 0], sizes = [8, 8], strides = [1, 1]} : vector<8x32xf32> to vector<8x8xf32>
    %24 = vector.extract_strided_slice %9 {offsets = [0, 0], sizes = [8, 8], strides = [1, 1]} : vector<8x32xf32> to vector<8x8xf32>
    %25 = vector.extract_strided_slice %10 {offsets = [0, 0], sizes = [8, 8], strides = [1, 1]} : vector<8x32xf32> to vector<8x8xf32>
    %26 = arith.truncf %23 : vector<8x8xf32> to vector<8x8xbf16>
    %27 = arith.truncf %24 : vector<8x8xf32> to vector<8x8xbf16>
    %cst_14 = arith.constant dense<0.000000e+00> : vector<8x8xf32>
    %28 = tpu.matmul %26, %27, %cst_14 {dimension_numbers = #tpu.dot_dimension_numbers<[1], [1], [0], [0], [0, 0, 1, 0], [], []>} : vector<8x8xbf16>, vector<8x8xbf16>, vector<8x8xf32> -> vector<8x8xf32>
    %29 = arith.addf %28, %22 : vector<8x8xf32>
    %cst_15 = arith.constant dense<0xFF800000> : vector<8xf32>
    %30 = vector.multi_reduction <maximumf>, %29, %cst_15 [1] : vector<8x8xf32> to vector<8xf32>
    %31 = vector.shape_cast %30 : vector<8xf32> to vector<8x1xf32>
    %32 = vector.broadcast %31 : vector<8x1xf32> to vector<8x8xf32>
    %33 = arith.subf %29, %32 : vector<8x8xf32>
    %34 = math.exp %33 : vector<8x8xf32>
    %cst_16 = arith.constant dense<0.000000e+00> : vector<8xf32>
    %35 = vector.multi_reduction <add>, %34, %cst_16 [1] : vector<8x8xf32> to vector<8xf32>
    %36 = vector.shape_cast %35 : vector<8xf32> to vector<8x1xf32>
    %cst_17 = arith.constant 1.000000e-30 : f32
    %37 = vector.broadcast %cst_17 : f32 to vector<8x1xf32>
    %38 = arith.maximumf %36, %37 : vector<8x1xf32>
    %39 = tpu.reciprocal %38 {approx = true} : vector<8x1xf32> -> vector<8x1xf32>
    %40 = vector.broadcast %39 : vector<8x1xf32> to vector<8x8xf32>
    %41 = arith.mulf %34, %40 : vector<8x8xf32>
    %42 = arith.truncf %41 : vector<8x8xf32> to vector<8x8xbf16>
    %43 = arith.truncf %25 : vector<8x8xf32> to vector<8x8xbf16>
    %cst_18 = arith.constant dense<0.000000e+00> : vector<8x8xf32>
    %44 = tpu.matmul %42, %43, %cst_18 {dimension_numbers = #tpu.dot_dimension_numbers<[1], [0], [0], [1], [0, 0, 1, 1], [], []>} : vector<8x8xbf16>, vector<8x8xbf16>, vector<8x8xf32> -> vector<8x8xf32>
    %45 = vector.extract_strided_slice %8 {offsets = [0, 8], sizes = [8, 8], strides = [1, 1]} : vector<8x32xf32> to vector<8x8xf32>
    %46 = vector.extract_strided_slice %9 {offsets = [0, 8], sizes = [8, 8], strides = [1, 1]} : vector<8x32xf32> to vector<8x8xf32>
    %47 = vector.extract_strided_slice %10 {offsets = [0, 8], sizes = [8, 8], strides = [1, 1]} : vector<8x32xf32> to vector<8x8xf32>
    %48 = arith.truncf %45 : vector<8x8xf32> to vector<8x8xbf16>
    %49 = arith.truncf %46 : vector<8x8xf32> to vector<8x8xbf16>
    %cst_19 = arith.constant dense<0.000000e+00> : vector<8x8xf32>
    %50 = tpu.matmul %48, %49, %cst_19 {dimension_numbers = #tpu.dot_dimension_numbers<[1], [1], [0], [0], [0, 0, 1, 0], [], []>} : vector<8x8xbf16>, vector<8x8xbf16>, vector<8x8xf32> -> vector<8x8xf32>
    %51 = arith.addf %50, %22 : vector<8x8xf32>
    %cst_20 = arith.constant dense<0xFF800000> : vector<8xf32>
    %52 = vector.multi_reduction <maximumf>, %51, %cst_20 [1] : vector<8x8xf32> to vector<8xf32>
    %53 = vector.shape_cast %52 : vector<8xf32> to vector<8x1xf32>
    %54 = vector.broadcast %53 : vector<8x1xf32> to vector<8x8xf32>
    %55 = arith.subf %51, %54 : vector<8x8xf32>
    %56 = math.exp %55 : vector<8x8xf32>
    %cst_21 = arith.constant dense<0.000000e+00> : vector<8xf32>
    %57 = vector.multi_reduction <add>, %56, %cst_21 [1] : vector<8x8xf32> to vector<8xf32>
    %58 = vector.shape_cast %57 : vector<8xf32> to vector<8x1xf32>
    %cst_22 = arith.constant 1.000000e-30 : f32
    %59 = vector.broadcast %cst_22 : f32 to vector<8x1xf32>
    %60 = arith.maximumf %58, %59 : vector<8x1xf32>
    %61 = tpu.reciprocal %60 {approx = true} : vector<8x1xf32> -> vector<8x1xf32>
    %62 = vector.broadcast %61 : vector<8x1xf32> to vector<8x8xf32>
    %63 = arith.mulf %56, %62 : vector<8x8xf32>
    %64 = arith.truncf %63 : vector<8x8xf32> to vector<8x8xbf16>
    %65 = arith.truncf %47 : vector<8x8xf32> to vector<8x8xbf16>
    %cst_23 = arith.constant dense<0.000000e+00> : vector<8x8xf32>
    %66 = tpu.matmul %64, %65, %cst_23 {dimension_numbers = #tpu.dot_dimension_numbers<[1], [0], [0], [1], [0, 0, 1, 1], [], []>} : vector<8x8xbf16>, vector<8x8xbf16>, vector<8x8xf32> -> vector<8x8xf32>
    %67 = vector.extract_strided_slice %8 {offsets = [0, 16], sizes = [8, 8], strides = [1, 1]} : vector<8x32xf32> to vector<8x8xf32>
    %68 = vector.extract_strided_slice %9 {offsets = [0, 16], sizes = [8, 8], strides = [1, 1]} : vector<8x32xf32> to vector<8x8xf32>
    %69 = vector.extract_strided_slice %10 {offsets = [0, 16], sizes = [8, 8], strides = [1, 1]} : vector<8x32xf32> to vector<8x8xf32>
    %70 = arith.truncf %67 : vector<8x8xf32> to vector<8x8xbf16>
    %71 = arith.truncf %68 : vector<8x8xf32> to vector<8x8xbf16>
    %cst_24 = arith.constant dense<0.000000e+00> : vector<8x8xf32>
    %72 = tpu.matmul %70, %71, %cst_24 {dimension_numbers = #tpu.dot_dimension_numbers<[1], [1], [0], [0], [0, 0, 1, 0], [], []>} : vector<8x8xbf16>, vector<8x8xbf16>, vector<8x8xf32> -> vector<8x8xf32>
    %73 = arith.addf %72, %22 : vector<8x8xf32>
    %cst_25 = arith.constant dense<0xFF800000> : vector<8xf32>
    %74 = vector.multi_reduction <maximumf>, %73, %cst_25 [1] : vector<8x8xf32> to vector<8xf32>
    %75 = vector.shape_cast %74 : vector<8xf32> to vector<8x1xf32>
    %76 = vector.broadcast %75 : vector<8x1xf32> to vector<8x8xf32>
    %77 = arith.subf %73, %76 : vector<8x8xf32>
    %78 = math.exp %77 : vector<8x8xf32>
    %cst_26 = arith.constant dense<0.000000e+00> : vector<8xf32>
    %79 = vector.multi_reduction <add>, %78, %cst_26 [1] : vector<8x8xf32> to vector<8xf32>
    %80 = vector.shape_cast %79 : vector<8xf32> to vector<8x1xf32>
    %cst_27 = arith.constant 1.000000e-30 : f32
    %81 = vector.broadcast %cst_27 : f32 to vector<8x1xf32>
    %82 = arith.maximumf %80, %81 : vector<8x1xf32>
    %83 = tpu.reciprocal %82 {approx = true} : vector<8x1xf32> -> vector<8x1xf32>
    %84 = vector.broadcast %83 : vector<8x1xf32> to vector<8x8xf32>
    %85 = arith.mulf %78, %84 : vector<8x8xf32>
    %86 = arith.truncf %85 : vector<8x8xf32> to vector<8x8xbf16>
    %87 = arith.truncf %69 : vector<8x8xf32> to vector<8x8xbf16>
    %cst_28 = arith.constant dense<0.000000e+00> : vector<8x8xf32>
    %88 = tpu.matmul %86, %87, %cst_28 {dimension_numbers = #tpu.dot_dimension_numbers<[1], [0], [0], [1], [0, 0, 1, 1], [], []>} : vector<8x8xbf16>, vector<8x8xbf16>, vector<8x8xf32> -> vector<8x8xf32>
    %89 = vector.extract_strided_slice %8 {offsets = [0, 24], sizes = [8, 8], strides = [1, 1]} : vector<8x32xf32> to vector<8x8xf32>
    %90 = vector.extract_strided_slice %9 {offsets = [0, 24], sizes = [8, 8], strides = [1, 1]} : vector<8x32xf32> to vector<8x8xf32>
    %91 = vector.extract_strided_slice %10 {offsets = [0, 24], sizes = [8, 8], strides = [1, 1]} : vector<8x32xf32> to vector<8x8xf32>
    %92 = arith.truncf %89 : vector<8x8xf32> to vector<8x8xbf16>
    %93 = arith.truncf %90 : vector<8x8xf32> to vector<8x8xbf16>
    %cst_29 = arith.constant dense<0.000000e+00> : vector<8x8xf32>
    %94 = tpu.matmul %92, %93, %cst_29 {dimension_numbers = #tpu.dot_dimension_numbers<[1], [1], [0], [0], [0, 0, 1, 0], [], []>} : vector<8x8xbf16>, vector<8x8xbf16>, vector<8x8xf32> -> vector<8x8xf32>
    %95 = arith.addf %94, %22 : vector<8x8xf32>
    %cst_30 = arith.constant dense<0xFF800000> : vector<8xf32>
    %96 = vector.multi_reduction <maximumf>, %95, %cst_30 [1] : vector<8x8xf32> to vector<8xf32>
    %97 = vector.shape_cast %96 : vector<8xf32> to vector<8x1xf32>
    %98 = vector.broadcast %97 : vector<8x1xf32> to vector<8x8xf32>
    %99 = arith.subf %95, %98 : vector<8x8xf32>
    %100 = math.exp %99 : vector<8x8xf32>
    %cst_31 = arith.constant dense<0.000000e+00> : vector<8xf32>
    %101 = vector.multi_reduction <add>, %100, %cst_31 [1] : vector<8x8xf32> to vector<8xf32>
    %102 = vector.shape_cast %101 : vector<8xf32> to vector<8x1xf32>
    %cst_32 = arith.constant 1.000000e-30 : f32
    %103 = vector.broadcast %cst_32 : f32 to vector<8x1xf32>
    %104 = arith.maximumf %102, %103 : vector<8x1xf32>
    %105 = tpu.reciprocal %104 {approx = true} : vector<8x1xf32> -> vector<8x1xf32>
    %106 = vector.broadcast %105 : vector<8x1xf32> to vector<8x8xf32>
    %107 = arith.mulf %100, %106 : vector<8x8xf32>
    %108 = arith.truncf %107 : vector<8x8xf32> to vector<8x8xbf16>
    %109 = arith.truncf %91 : vector<8x8xf32> to vector<8x8xbf16>
    %cst_33 = arith.constant dense<0.000000e+00> : vector<8x8xf32>
    %110 = tpu.matmul %108, %109, %cst_33 {dimension_numbers = #tpu.dot_dimension_numbers<[1], [0], [0], [1], [0, 0, 1, 1], [], []>} : vector<8x8xbf16>, vector<8x8xbf16>, vector<8x8xf32> -> vector<8x8xf32>
    %111 = tpu.concatenate %44, %66, %88, %110 in 1 : vector<8x8xf32>, vector<8x8xf32>, vector<8x8xf32>, vector<8x8xf32> -> vector<8x32xf32>
    %c0_34 = arith.constant 0 : index
    %c0_35 = arith.constant 0 : index
    %112 = vector.load %arg4[%c0_34, %c0_35] : memref<32x32xbf16, #tpu.memory_space<vmem>>, vector<32x32xbf16>
    %113 = arith.truncf %111 : vector<8x32xf32> to vector<8x32xbf16>
    %cst_36 = arith.constant dense<0.000000e+00> : vector<8x32xf32>
    %114 = tpu.matmul %113, %112, %cst_36 {dimension_numbers = #tpu.dot_dimension_numbers<[1], [0], [0], [1], [0, 0, 1, 1], [], []>} : vector<8x32xbf16>, vector<32x32xbf16>, vector<8x32xf32> -> vector<8x32xf32>
    %c0_37 = arith.constant 0 : index
    %c0_38 = arith.constant 0 : index
    %115 = vector.load %arg5[%c0_37, %c0_38] : memref<1x32xf32, #tpu.memory_space<vmem>>, vector<1x32xf32>
    %116 = vector.broadcast %115 : vector<1x32xf32> to vector<8x32xf32>
    %117 = arith.addf %114, %116 : vector<8x32xf32>
    %118 = arith.addf %1, %117 : vector<8x32xf32>
    %c0_39 = arith.constant 0 : index
    %c0_40 = arith.constant 0 : index
    %119 = vector.load %arg6[%c0_39, %c0_40] : memref<1x32xf32, #tpu.memory_space<vmem>>, vector<1x32xf32>
    %c0_41 = arith.constant 0 : index
    %c0_42 = arith.constant 0 : index
    %120 = vector.load %arg7[%c0_41, %c0_42] : memref<1x32xf32, #tpu.memory_space<vmem>>, vector<1x32xf32>
    %cst_43 = arith.constant dense<0.000000e+00> : vector<8xf32>
    %121 = vector.multi_reduction <add>, %118, %cst_43 [1] : vector<8x32xf32> to vector<8xf32>
    %122 = vector.shape_cast %121 : vector<8xf32> to vector<8x1xf32>
    %cst_44 = arith.constant 3.200000e+01 : f32
    %123 = vector.broadcast %cst_44 : f32 to vector<8x1xf32>
    %124 = arith.divf %122, %123 : vector<8x1xf32>
    %125 = arith.mulf %118, %118 : vector<8x32xf32>
    %cst_45 = arith.constant dense<0.000000e+00> : vector<8xf32>
    %126 = vector.multi_reduction <add>, %125, %cst_45 [1] : vector<8x32xf32> to vector<8xf32>
    %127 = vector.shape_cast %126 : vector<8xf32> to vector<8x1xf32>
    %cst_46 = arith.constant 3.200000e+01 : f32
    %128 = vector.broadcast %cst_46 : f32 to vector<8x1xf32>
    %129 = arith.divf %127, %128 : vector<8x1xf32>
    %130 = arith.mulf %124, %124 : vector<8x1xf32>
    %131 = arith.subf %129, %130 : vector<8x1xf32>
    %cst_47 = arith.constant 0.000000e+00 : f32
    %132 = vector.broadcast %cst_47 : f32 to vector<8x1xf32>
    %133 = arith.maximumf %131, %132 : vector<8x1xf32>
    %134 = vector.broadcast %124 : vector<8x1xf32> to vector<8x32xf32>
    %135 = arith.subf %118, %134 : vector<8x32xf32>
    %cst_48 = arith.constant 9.99999974E-6 : f32
    %136 = vector.broadcast %cst_48 : f32 to vector<8x1xf32>
    %137 = arith.addf %133, %136 : vector<8x1xf32>
    %138 = math.rsqrt %137 : vector<8x1xf32>
    %139 = vector.broadcast %138 : vector<8x1xf32> to vector<8x32xf32>
    %140 = arith.mulf %135, %139 : vector<8x32xf32>
    %141 = vector.broadcast %119 : vector<1x32xf32> to vector<8x32xf32>
    %142 = arith.mulf %140, %141 : vector<8x32xf32>
    %143 = vector.broadcast %120 : vector<1x32xf32> to vector<8x32xf32>
    %144 = arith.addf %142, %143 : vector<8x32xf32>
    %c0_49 = arith.constant 0 : index
    %c0_50 = arith.constant 0 : index
    %c0_51 = arith.constant 0 : index
    %145 = vector.load %arg8[%c0_49, %c0_50, %c0_51] : memref<1x8x32xf32, #tpu.memory_space<vmem>>, vector<1x8x32xf32>
    %146 = vector.shape_cast %145 : vector<1x8x32xf32> to vector<8x32xf32>
    %147 = vector.shape_cast %144 : vector<8x32xf32> to vector<1x8x32xf32>
    tpu.vector_store %arg8[%c0_49, %c0_50, %c0_51], %147 {strides = array<i32>} : memref<1x8x32xf32, #tpu.memory_space<vmem>>, vector<1x8x32xf32>,
    return
  }
  func.func @transform_0(%arg0: i32) -> (i32, i32, i32) {
    %c0_i32 = arith.constant 0 : i32
    %c0_i32_0 = arith.constant 0 : i32
    %c0_i32_1 = arith.constant 0 : i32
    return %arg0, %c0_i32, %c0_i32_0 : i32, i32, i32
  }
  func.func @transform_1(%arg0: i32) -> (i32, i32) {
    %c0_i32 = arith.constant 0 : i32
    %c0_i32_0 = arith.constant 0 : i32
    %c0_i32_1 = arith.constant 0 : i32
    return %c0_i32, %c0_i32_0 : i32, i32
  }
  func.func @transform_2(%arg0: i32) -> (i32, i32) {
    %c0_i32 = arith.constant 0 : i32
    %c0_i32_0 = arith.constant 0 : i32
    %c0_i32_1 = arith.constant 0 : i32
    return %c0_i32, %c0_i32_0 : i32, i32
  }
  func.func @transform_3(%arg0: i32) -> (i32, i32) {
    %c0_i32 = arith.constant 0 : i32
    %c0_i32_0 = arith.constant 0 : i32
    %c0_i32_1 = arith.constant 0 : i32
    return %c0_i32, %c0_i32_0 : i32, i32
  }
  func.func @transform_4(%arg0: i32) -> (i32, i32) {
    %c0_i32 = arith.constant 0 : i32
    %c0_i32_0 = arith.constant 0 : i32
    %c0_i32_1 = arith.constant 0 : i32
    return %c0_i32, %c0_i32_0 : i32, i32
  }
  func.func @transform_5(%arg0: i32) -> (i32, i32) {
    %c0_i32 = arith.constant 0 : i32
    %c0_i32_0 = arith.constant 0 : i32
    %c0_i32_1 = arith.constant 0 : i32
    return %c0_i32, %c0_i32_0 : i32, i32
  }
  func.func @transform_6(%arg0: i32) -> (i32, i32) {
    %c0_i32 = arith.constant 0 : i32
    %c0_i32_0 = arith.constant 0 : i32
    %c0_i32_1 = arith.constant 0 : i32
    return %c0_i32, %c0_i32_0 : i32, i32
  }
  func.func @transform_7(%arg0: i32) -> (i32, i32, i32) {
    %c0_i32 = arith.constant 0 : i32
    %c0_i32_0 = arith.constant 0 : i32
    %c0_i32_1 = arith.constant 0 : i32
    return %arg0, %c0_i32, %c0_i32_0 : i32, i32, i32
  }
  func.func @transform_8(%arg0: i32) -> (i32, i32, i32) {
    %c0_i32 = arith.constant 0 : i32
    %c0_i32_0 = arith.constant 0 : i32
    %c0_i32_1 = arith.constant 0 : i32
    return %arg0, %c0_i32, %c0_i32_0 : i32, i32, i32
  }
  func.func @transform_9(%arg0: i32) -> (i32, i32, i32) {
    %c0_i32 = arith.constant 0 : i32
    %c0_i32_0 = arith.constant 0 : i32
    %c0_i32_1 = arith.constant 0 : i32
    return %arg0, %c0_i32, %c0_i32_0 : i32, i32, i32
  }
}

</mosaic_0001>

<llo_original>
// kernel: tpu_custom_call.1
$region0: #{tpu_custom_call.1}
  #allocation0 [shape = 'u32[]', space=smem, size = 0x4, offset = 0x4, fixed_abs, tag = 'smem constant byte address 0x4 - core index']
  #allocation1 [shape = 'u32[144,128]{1,0:T(1,128)}', space=vmem, size = 0x12000, scoped, tag = 'internal scratch']
  %s0 = inlined_call_operand.hbm [shape: f32[2,8,32], index: 0, kind: input, shape index: {}]
  %s1 = inlined_call_operand.hbm [shape: bf16[32,96], index: 1, kind: input, shape index: {}]
  %s2 = inlined_call_operand.hbm [shape: f32[1,96], index: 2, kind: input, shape index: {}]
  %s3 = inlined_call_operand.hbm [shape: bf16[32,32], index: 3, kind: input, shape index: {}]
  %s4 = inlined_call_operand.hbm [shape: f32[1,32], index: 4, kind: input, shape index: {}]
  %s5 = inlined_call_operand.hbm [shape: f32[1,32], index: 5, kind: input, shape index: {}]
  %s6 = inlined_call_operand.hbm [shape: f32[1,32], index: 6, kind: input, shape index: {}]
  %s7 = inlined_call_operand.hbm [shape: f32[2,8,32], index: 7, kind: output, shape index: {0}]
  %s8 = inlined_call_operand.hbm [shape: f32[2,8,32], index: 8, kind: output, shape index: {1}]
  %s9 = inlined_call_operand.hbm [shape: f32[2,8,32], index: 9, kind: output, shape index: {2}]
  %10 = xla_tuple %s7, %s8, %s9
  %s11 = sld [smem:[#allocation0]]
  $region105: #{tpu_custom_call.1} parent=0
    _
  %s13 = ssub.s32 1, %s11
  %s14 = scalar_select 0, %s13, %s11
  $region1: #{tpu_custom_call.1} parent=0
    #allocation2 [shape = 'u8[8192]{0}', space=vmem, size = 0x2000, scoped, tag = 'input window, operand 0']
    #allocation3 [shape = 's32[2]{0}', space=sflag, size = 0x8, scoped, tag = 'scoped memory for tpu_custom_call.1']
    #allocation4 [shape = 's32[2]{0}', space=sflag, size = 0x8, scoped, tag = 'scoped memory for tpu_custom_call.1']
    #allocation5 [shape = 'u8[8192]{0}', space=vmem, size = 0x2000, scoped, tag = 'input window, operand 1, single buffered']
    #allocation6 [shape = 's32[1]{0}', space=sflag, size = 0x4, scoped, tag = 'scoped memory for tpu_custom_call.1']
    #allocation7 [shape = 'u8[512]{0}', space=vmem, size = 0x400, scoped, tag = 'input window, operand 2, single buffered']
    #allocation8 [shape = 'u8[8192]{0}', space=vmem, size = 0x2000, scoped, tag = 'input window, operand 3, single buffered']
    #allocation9 [shape = 's32[1]{0}', space=sflag, size = 0x4, scoped, tag = 'scoped memory for tpu_custom_call.1']
    #allocation10 [shape = 'u8[512]{0}', space=vmem, size = 0x400, scoped, tag = 'input window, operand 4, single buffered']
    #allocation11 [shape = 'u8[512]{0}', space=vmem, size = 0x400, scoped, tag = 'input window, operand 5, single buffered']
    #allocation12 [shape = 's32[1]{0}', space=sflag, size = 0x4, scoped, tag = 'scoped memory for tpu_custom_call.1']
    #allocation13 [shape = 'u8[512]{0}', space=vmem, size = 0x400, scoped, tag = 'input window, operand 6, single buffered']
    #allocation14 [shape = 'u8[8192]{0}', space=vmem, size = 0x2000, scoped, tag = 'output window, operand 0']
    #allocation15 [shape = 'u8[8192]{0}', space=vmem, size = 0x2000, scoped, tag = 'output window, operand 1']
    #allocation16 [shape = 's32[2]{0}', space=sflag, size = 0x8, scoped, tag = 'scoped memory for tpu_custom_call.1']
    #allocation17 [shape = 'u8[8192]{0}', space=vmem, size = 0x2000, scoped, tag = 'output window, operand 2']
    %15 = vsyncpa [#allocation3], 0
    %s16 = scalar_lea.sflag [#allocation3], 1
    %17 = vsyncpa %s16, 0
    %18 = vsyncpa [#allocation6], 0
    %19 = vsyncpa [#allocation9], 0
    %20 = vsyncpa [#allocation12], 0
    %21 = vsyncpa [#allocation4], 0
    %s22 = scalar_lea.sflag [#allocation4], 1
    %23 = vsyncpa %s22, 0
    %24 = vsyncpa [#allocation16], 0
    %s25 = scalar_lea.sflag [#allocation16], 1
    %26 = vsyncpa %s25, 0
    loop: start=0, step=1, limit=4
    $region2: #{tpu_custom_call.1} parent=1 // loop_pre_header
      _
    $region3: #{tpu_custom_call.1} parent=1 // loop_header
      %s28 = sphi 0, %s32
      %p29 = scmp.ge.s32.totalorder %s28, 4
      %s38 = sphi 0, %s40
      %s41 = sphi 0, %s38
      %s42 = sphi 0, %s41
      %s58 = sphi 0, %s42
      %s62 = sphi 0, %s62
      %s64 = sphi 0, %s62
      %s65 = sphi 0, %s64
      %s79 = sphi 0, %s65
      %s83 = sphi 0, %s83
      %s85 = sphi 0, %s83
      %s86 = sphi 0, %s85
      %s100 = sphi 0, %s86
      %s104 = sphi 0, %s104
      %s106 = sphi 0, %s104
      %s107 = sphi 0, %s106
      %s121 = sphi 0, %s107
      %s125 = sphi 0, %s125
      %s127 = sphi 0, %s125
      %s128 = sphi 0, %s127
      %s142 = sphi 0, %s128
      %s146 = sphi 0, %s146
      %s148 = sphi 0, %s146
      %s149 = sphi 0, %s148
      %s163 = sphi 0, %s149
      %s167 = sphi 0, %s167
      %s169 = sphi 0, %s167
      %s170 = sphi 0, %s169
      %s184 = sphi 0, %s170
      %s190 = sphi 0, %s192
      %s193 = sphi 0, %s190
      %s194 = sphi 0, %s193
      %s210 = sphi 0, %s194
      %s216 = sphi 0, %s218
      %s219 = sphi 0, %s216
      %s220 = sphi 0, %s219
      %s236 = sphi 0, %s220
      %s242 = sphi 0, %s244
      %s245 = sphi 0, %s242
      %s246 = sphi 0, %s245
      %s262 = sphi 0, %s246
    $region4: #{tpu_custom_call.1} parent=1 // loop_header_branch
      %31 = sbr.rel (%p29) target = $region8
    $region5: #{tpu_custom_call.1} parent=1 // loop_body
      %s33 = ssub.s32 %s28, 1
      %s34 = ssub.s32 %s28, 2
      %s35 = sadd.s32 %s28, 1
      %s36 = ssub.s32 %s28, %s35
      %p37 = scmp.eq.s32.totalorder %s36, 0
      %s39 = sadd.s32 %s38, 1
      %s40 = scalar_select %p37, %s38, %s39
      %p43 = pneg %p37
      %p44 = scmp.eq.s32.totalorder %s28, 1
      %p45 = por %p43, %p44
      %p46 = scmp.ne.s32.totalorder %s38, %s41
      %p47 = scmp.eq.s32.totalorder %s28, 0
      %p48 = por %p46, %p47
      %p49 = scmp.ne.s32.totalorder %s38, %s41
      %p50 = scmp.eq.s32.totalorder %s33, 1
      %p51 = por %p49, %p50
      %p52 = scmp.ne.s32.totalorder %s41, %s42
      %p53 = scmp.eq.s32.totalorder %s33, 0
      %p54 = por %p52, %p53
      %p55 = scmp.ne.s32.totalorder %s41, %s42
      %p56 = scmp.eq.s32.totalorder %s34, 1
      %p57 = por %p55, %p56
      %p59 = scmp.ne.s32.totalorder %s42, %s58
      %p60 = scmp.eq.s32.totalorder %s34, 0
      %p61 = por %p59, %p60
      %s63 = sadd.s32 %s62, 1
      %p66 = scmp.eq.s32.totalorder %s28, 1
      %p67 = scmp.ne.s32.totalorder %s62, %s64
      %p68 = scmp.eq.s32.totalorder %s28, 0
      %p69 = por %p67, %p68
      %p70 = scmp.ne.s32.totalorder %s62, %s64
      %p71 = scmp.eq.s32.totalorder %s33, 1
      %p72 = por %p70, %p71
      %p73 = scmp.ne.s32.totalorder %s64, %s65
      %p74 = scmp.eq.s32.totalorder %s33, 0
      %p75 = por %p73, %p74
      %p76 = scmp.ne.s32.totalorder %s64, %s65
      %p77 = scmp.eq.s32.totalorder %s34, 1
      %p78 = por %p76, %p77
      %p80 = scmp.ne.s32.totalorder %s65, %s79
      %p81 = scmp.eq.s32.totalorder %s34, 0
      %p82 = por %p80, %p81
      %s84 = sadd.s32 %s83, 1
      %p87 = scmp.eq.s32.totalorder %s28, 1
      %p88 = scmp.ne.s32.totalorder %s83, %s85
      %p89 = scmp.eq.s32.totalorder %s28, 0
      %p90 = por %p88, %p89
      %p91 = scmp.ne.s32.totalorder %s83, %s85
      %p92 = scmp.eq.s32.totalorder %s33, 1
      %p93 = por %p91, %p92
      %p94 = scmp.ne.s32.totalorder %s85, %s86
      %p95 = scmp.eq.s32.totalorder %s33, 0
      %p96 = por %p94, %p95
      %p97 = scmp.ne.s32.totalorder %s85, %s86
      %p98 = scmp.eq.s32.totalorder %s34, 1
      %p99 = por %p97, %p98
      %p101 = scmp.ne.s32.totalorder %s86, %s100
      %p102 = scmp.eq.s32.totalorder %s34, 0
      %p103 = por %p101, %p102
      %s105 = sadd.s32 %s104, 1
      %p108 = scmp.eq.s32.totalorder %s28, 1
      %p109 = scmp.ne.s32.totalorder %s104, %s106
      %p110 = scmp.eq.s32.totalorder %s28, 0
      %p111 = por %p109, %p110
      %p112 = scmp.ne.s32.totalorder %s104, %s106
      %p113 = scmp.eq.s32.totalorder %s33, 1
      %p114 = por %p112, %p113
      %p115 = scmp.ne.s32.totalorder %s106, %s107
      %p116 = scmp.eq.s32.totalorder %s33, 0
      %p117 = por %p115, %p116
      %p118 = scmp.ne.s32.totalorder %s106, %s107
      %p119 = scmp.eq.s32.totalorder %s34, 1
      %p120 = por %p118, %p119
      %p122 = scmp.ne.s32.totalorder %s107, %s121
      %p123 = scmp.eq.s32.totalorder %s34, 0
      %p124 = por %p122, %p123
      %s126 = sadd.s32 %s125, 1
      %p129 = scmp.eq.s32.totalorder %s28, 1
      %p130 = scmp.ne.s32.totalorder %s125, %s127
      %p131 = scmp.eq.s32.totalorder %s28, 0
      %p132 = por %p130, %p131
      %p133 = scmp.ne.s32.totalorder %s125, %s127
      %p134 = scmp.eq.s32.totalorder %s33, 1
      %p135 = por %p133, %p134
      %p136 = scmp.ne.s32.totalorder %s127, %s128
      %p137 = scmp.eq.s32.totalorder %s33, 0
      %p138 = por %p136, %p137
      %p139 = scmp.ne.s32.totalorder %s127, %s128
      %p140 = scmp.eq.s32.totalorder %s34, 1
      %p141 = por %p139, %p140
      %p143 = scmp.ne.s32.totalorder %s128, %s142
      %p144 = scmp.eq.s32.totalorder %s34, 0
      %p145 = por %p143, %p144
      %s147 = sadd.s32 %s146, 1
      %p150 = scmp.eq.s32.totalorder %s28, 1
      %p151 = scmp.ne.s32.totalorder %s146, %s148
      %p152 = scmp.eq.s32.totalorder %s28, 0
      %p153 = por %p151, %p152
      %p154 = scmp.ne.s32.totalorder %s146, %s148
      %p155 = scmp.eq.s32.totalorder %s33, 1
      %p156 = por %p154, %p155
      %p157 = scmp.ne.s32.totalorder %s148, %s149
      %p158 = scmp.eq.s32.totalorder %s33, 0
      %p159 = por %p157, %p158
      %p160 = scmp.ne.s32.totalorder %s148, %s149
      %p161 = scmp.eq.s32.totalorder %s34, 1
      %p162 = por %p160, %p161
      %p164 = scmp.ne.s32.totalorder %s149, %s163
      %p165 = scmp.eq.s32.totalorder %s34, 0
      %p166 = por %p164, %p165
      %s168 = sadd.s32 %s167, 1
      %p171 = scmp.eq.s32.totalorder %s28, 1
      %p172 = scmp.ne.s32.totalorder %s167, %s169
      %p173 = scmp.eq.s32.totalorder %s28, 0
      %p174 = por %p172, %p173
      %p175 = scmp.ne.s32.totalorder %s167, %s169
      %p176 = scmp.eq.s32.totalorder %s33, 1
      %p177 = por %p175, %p176
      %p178 = scmp.ne.s32.totalorder %s169, %s170
      %p179 = scmp.eq.s32.totalorder %s33, 0
      %p180 = por %p178, %p179
      %p181 = scmp.ne.s32.totalorder %s169, %s170
      %p182 = scmp.eq.s32.totalorder %s34, 1
      %p183 = por %p181, %p182
      %p185 = scmp.ne.s32.totalorder %s170, %s184
      %p186 = scmp.eq.s32.totalorder %s34, 0
      %p187 = por %p185, %p186
      %s188 = ssub.s32 %s28, %s35
      %p189 = scmp.eq.s32.totalorder %s188, 0
      %s191 = sadd.s32 %s190, 1
      %s192 = scalar_select %p189, %s190, %s191
      %p195 = pneg %p189
      %p196 = scmp.eq.s32.totalorder %s28, 1
      %p197 = por %p195, %p196
      %p198 = scmp.ne.s32.totalorder %s190, %s193
      %p199 = scmp.eq.s32.totalorder %s28, 0
      %p200 = por %p198, %p199
      %p201 = scmp.ne.s32.totalorder %s190, %s193
      %p202 = scmp.eq.s32.totalorder %s33, 1
      %p203 = por %p201, %p202
      %p204 = scmp.ne.s32.totalorder %s193, %s194
      %p205 = scmp.eq.s32.totalorder %s33, 0
      %p206 = por %p204, %p205
      %p207 = scmp.ne.s32.totalorder %s193, %s194
      %p208 = scmp.eq.s32.totalorder %s34, 1
      %p209 = por %p207, %p208
      %p211 = scmp.ne.s32.totalorder %s194, %s210
      %p212 = scmp.eq.s32.totalorder %s34, 0
      %p213 = por %p211, %p212
      %s214 = ssub.s32 %s28, %s35
      %p215 = scmp.eq.s32.totalorder %s214, 0
      %s217 = sadd.s32 %s216, 1
      %s218 = scalar_select %p215, %s216, %s217
      %p221 = pneg %p215
      %p222 = scmp.eq.s32.totalorder %s28, 1
      %p223 = por %p221, %p222
      %p224 = scmp.ne.s32.totalorder %s216, %s219
      %p225 = scmp.eq.s32.totalorder %s28, 0
      %p226 = por %p224, %p225
      %p227 = scmp.ne.s32.totalorder %s216, %s219
      %p228 = scmp.eq.s32.totalorder %s33, 1
      %p229 = por %p227, %p228
      %p230 = scmp.ne.s32.totalorder %s219, %s220
      %p231 = scmp.eq.s32.totalorder %s33, 0
      %p232 = por %p230, %p231
      %p233 = scmp.ne.s32.totalorder %s219, %s220
      %p234 = scmp.eq.s32.totalorder %s34, 1
      %p235 = por %p233, %p234
      %p237 = scmp.ne.s32.totalorder %s220, %s236
      %p238 = scmp.eq.s32.totalorder %s34, 0
      %p239 = por %p237, %p238
      %s240 = ssub.s32 %s28, %s35
      %p241 = scmp.eq.s32.totalorder %s240, 0
      %s243 = sadd.s32 %s242, 1
      %s244 = scalar_select %p241, %s242, %s243
      %p247 = pneg %p241
      %p248 = scmp.eq.s32.totalorder %s28, 1
      %p249 = por %p247, %p248
      %p250 = scmp.ne.s32.totalorder %s242, %s245
      %p251 = scmp.eq.s32.totalorder %s28, 0
      %p252 = por %p250, %p251
      %p253 = scmp.ne.s32.totalorder %s242, %s245
      %p254 = scmp.eq.s32.totalorder %s33, 1
      %p255 = por %p253, %p254
      %p256 = scmp.ne.s32.totalorder %s245, %s246
      %p257 = scmp.eq.s32.totalorder %s33, 0
      %p258 = por %p256, %p257
      %p259 = scmp.ne.s32.totalorder %s245, %s246
      %p260 = scmp.eq.s32.totalorder %s34, 1
      %p261 = por %p259, %p260
      %p263 = scmp.ne.s32.totalorder %s246, %s262
      %p264 = scmp.eq.s32.totalorder %s34, 0
      %p265 = por %p263, %p264
      %p266 = scmp.le.s32.totalorder 1, %s28
      %p267 = scmp.lt.s32.totalorder %s28, 3
      %p268 = pnand %p266, %p267
      %p269 = pneg %p268
      // Predicated region
      $region9: #{tpu_custom_call.1} parent=5 // pred_check
        _
      $region10: #{tpu_custom_call.1} parent=5 // pred_check_branch
        %271 = sbr.rel (%p268) target = $region12
      $region11: #{tpu_custom_call.1} parent=5 // pred_region
        %s272 = ssub.s32 %s28, 1
        // Predicated region
        $region13: #{tpu_custom_call.1} parent=11 // pred_check
          %p273 = pneg %p75
        $region14: #{tpu_custom_call.1} parent=11 // pred_check_branch
          %275 = sbr.rel (%p273) target = $region16
        $region15: #{tpu_custom_call.1} parent=11 // pred_region
          %s277 = ssub.s32 256, 256
          %278 = vsyncadd [#allocation6], %s277
          %s279 = sshll.u32 [#allocation5], 4
          %s280 = int_to_ptr.vmem [resolvable:$true] %s279
          %285 = dma.hbm_to_vmem [thread:$0]  %s1, 256, %s280, [#allocation6], 64, 64, 4
        $region16: #{tpu_custom_call.1} parent=11 // pred_fallthru
          _
        // Predicated region
        $region17: #{tpu_custom_call.1} parent=11 // pred_check
          %p286 = pneg %p96
        $region18: #{tpu_custom_call.1} parent=11 // pred_check_branch
          %288 = sbr.rel (%p286) target = $region20
        $region19: #{tpu_custom_call.1} parent=11 // pred_region
          %s290 = ssub.s32 16, 16
          %291 = vsyncadd [#allocation6], %s290
          %s293 = sshll.u32 [#allocation7], 4
          %s294 = int_to_ptr.vmem [resolvable:$true] %s293
          %296 = dma.hbm_to_vmem [thread:$0]  %s2, 16, %s294, [#allocation6]
        $region20: #{tpu_custom_call.1} parent=11 // pred_fallthru
          _
        // Predicated region
        $region21: #{tpu_custom_call.1} parent=11 // pred_check
          %p297 = pneg %p117
        $region22: #{tpu_custom_call.1} parent=11 // pred_check_branch
          %299 = sbr.rel (%p297) target = $region24
        $region23: #{tpu_custom_call.1} parent=11 // pred_region
          %s301 = ssub.s32 256, 256
          %302 = vsyncadd [#allocation9], %s301
          %s303 = sshll.u32 [#allocation8], 4
          %s304 = int_to_ptr.vmem [resolvable:$true] %s303
          %309 = dma.hbm_to_vmem [thread:$0]  %s3, 256, %s304, [#allocation9], 64, 64, 4
        $region24: #{tpu_custom_call.1} parent=11 // pred_fallthru
          _
        // Predicated region
        $region25: #{tpu_custom_call.1} parent=11 // pred_check
          %p310 = pneg %p138
        $region26: #{tpu_custom_call.1} parent=11 // pred_check_branch
          %312 = sbr.rel (%p310) target = $region28
        $region27: #{tpu_custom_call.1} parent=11 // pred_region
          %s314 = ssub.s32 16, 16
          %315 = vsyncadd [#allocation9], %s314
          %s317 = sshll.u32 [#allocation10], 4
          %s318 = int_to_ptr.vmem [resolvable:$true] %s317
          %320 = dma.hbm_to_vmem [thread:$0]  %s4, 16, %s318, [#allocation9]
        $region28: #{tpu_custom_call.1} parent=11 // pred_fallthru
          _
        // Predicated region
        $region29: #{tpu_custom_call.1} parent=11 // pred_check
          %p321 = pneg %p159
        $region30: #{tpu_custom_call.1} parent=11 // pred_check_branch
          %323 = sbr.rel (%p321) target = $region32
        $region31: #{tpu_custom_call.1} parent=11 // pred_region
          %s325 = ssub.s32 16, 16
          %326 = vsyncadd [#allocation12], %s325
          %s328 = sshll.u32 [#allocation11], 4
          %s329 = int_to_ptr.vmem [resolvable:$true] %s328
          %331 = dma.hbm_to_vmem [thread:$0]  %s5, 16, %s329, [#allocation12]
        $region32: #{tpu_custom_call.1} parent=11 // pred_fallthru
          _
        // Predicated region
        $region33: #{tpu_custom_call.1} parent=11 // pred_check
          %p332 = pneg %p180
        $region34: #{tpu_custom_call.1} parent=11 // pred_check_branch
          %334 = sbr.rel (%p332) target = $region36
        $region35: #{tpu_custom_call.1} parent=11 // pred_region
          %s336 = ssub.s32 16, 16
          %337 = vsyncadd [#allocation12], %s336
          %s339 = sshll.u32 [#allocation13], 4
          %s340 = int_to_ptr.vmem [resolvable:$true] %s339
          %342 = dma.hbm_to_vmem [thread:$0]  %s6, 16, %s340, [#allocation12]
        $region36: #{tpu_custom_call.1} parent=11 // pred_fallthru
          _
      $region12: #{tpu_custom_call.1} parent=5 // pred_fallthru
        _
      %p343 = scmp.lt.s32.totalorder %s28, 2
      // Predicated region
      $region37: #{tpu_custom_call.1} parent=5 // pred_check
        %p344 = pneg %p343
      $region38: #{tpu_custom_call.1} parent=5 // pred_check_branch
        %346 = sbr.rel (%p344) target = $region40
      $region39: #{tpu_custom_call.1} parent=5 // pred_region
        // Predicated region
        $region41: #{tpu_custom_call.1} parent=39 // pred_check
          %p347 = pneg %p48
        $region42: #{tpu_custom_call.1} parent=39 // pred_check_branch
          %349 = sbr.rel (%p347) target = $region44
        $region43: #{tpu_custom_call.1} parent=39 // pred_region
          %s350 = sand.u32 %s38, 1
          %s351 = scalar_lea.sflag [#allocation3], %s350
          %s352 = sand.u32 %s38, 1
          %s353 = smul.addr %s352, 8
          %s354 = scalar_lea.vmem [#allocation2], %s353
          %s356 = ssub.s32 128, 128
          %357 = vsyncadd %s351, %s356
          %s358 = smul.addr %s28, 128
          %s359 = scalar_lea.hbm %s0, %s358
          %s361 = sshll.u32 %s354, 4
          %s362 = int_to_ptr.vmem [resolvable:$true] %s361
          %364 = dma.hbm_to_vmem [thread:$0]  %s359, 128, %s362, %s351
        $region44: #{tpu_custom_call.1} parent=39 // pred_fallthru
          _
      $region40: #{tpu_custom_call.1} parent=5 // pred_fallthru
        _
      %p365 = scmp.le.s32.totalorder 1, %s28
      %p366 = scmp.lt.s32.totalorder %s28, 3
      %p367 = pnand %p365, %p366
      %p368 = pneg %p367
      // Predicated region
      $region45: #{tpu_custom_call.1} parent=5 // pred_check
        _
      $region46: #{tpu_custom_call.1} parent=5 // pred_check_branch
        %370 = sbr.rel (%p367) target = $region48
      $region47: #{tpu_custom_call.1} parent=5 // pred_region
        %s371 = ssub.s32 %s28, 1
        %s372 = sand.u32 %s41, 1
        %s373 = scalar_lea.sflag [#allocation3], %s372
        %s374 = sand.u32 %s41, 1
        %s375 = smul.addr %s374, 8
        %s376 = scalar_lea.vmem [#allocation2], %s375
        // Predicated region
        $region49: #{tpu_custom_call.1} parent=47 // pred_check
          %p377 = pneg %p54
        $region50: #{tpu_custom_call.1} parent=47 // pred_check_branch
          %379 = sbr.rel (%p377) target = $region52
        $region51: #{tpu_custom_call.1} parent=47 // pred_region
          %380 = dma.done %s373, 128
        $region52: #{tpu_custom_call.1} parent=47 // pred_fallthru
          _
        // Predicated region
        $region53: #{tpu_custom_call.1} parent=47 // pred_check
          %p381 = pneg %p75
        $region54: #{tpu_custom_call.1} parent=47 // pred_check_branch
          %383 = sbr.rel (%p381) target = $region56
        $region55: #{tpu_custom_call.1} parent=47 // pred_region
          %384 = dma.done [#allocation6], 256
        $region56: #{tpu_custom_call.1} parent=47 // pred_fallthru
          _
        // Predicated region
        $region57: #{tpu_custom_call.1} parent=47 // pred_check
          %p385 = pneg %p96
        $region58: #{tpu_custom_call.1} parent=47 // pred_check_branch
          %387 = sbr.rel (%p385) target = $region60
        $region59: #{tpu_custom_call.1} parent=47 // pred_region
          %388 = dma.done [#allocation6], 16
        $region60: #{tpu_custom_call.1} parent=47 // pred_fallthru
          _
        // Predicated region
        $region61: #{tpu_custom_call.1} parent=47 // pred_check
          %p389 = pneg %p117
        $region62: #{tpu_custom_call.1} parent=47 // pred_check_branch
          %391 = sbr.rel (%p389) target = $region64
        $region63: #{tpu_custom_call.1} parent=47 // pred_region
          %392 = dma.done [#allocation9], 256
        $region64: #{tpu_custom_call.1} parent=47 // pred_fallthru
          _
        // Predicated region
        $region65: #{tpu_custom_call.1} parent=47 // pred_check
          %p393 = pneg %p138
        $region66: #{tpu_custom_call.1} parent=47 // pred_check_branch
          %395 = sbr.rel (%p393) target = $region68
        $region67: #{tpu_custom_call.1} parent=47 // pred_region
          %396 = dma.done [#allocation9], 16
        $region68: #{tpu_custom_call.1} parent=47 // pred_fallthru
          _
        // Predicated region
        $region69: #{tpu_custom_call.1} parent=47 // pred_check
          %p397 = pneg %p159
        $region70: #{tpu_custom_call.1} parent=47 // pred_check_branch
          %399 = sbr.rel (%p397) target = $region72
        $region71: #{tpu_custom_call.1} parent=47 // pred_region
          %400 = dma.done [#allocation12], 16
        $region72: #{tpu_custom_call.1} parent=47 // pred_fallthru
          _
        // Predicated region
        $region73: #{tpu_custom_call.1} parent=47 // pred_check
          %p401 = pneg %p180
        $region74: #{tpu_custom_call.1} parent=47 // pred_check_branch
          %403 = sbr.rel (%p401) target = $region76
        $region75: #{tpu_custom_call.1} parent=47 // pred_region
          %404 = dma.done [#allocation12], 16
        $region76: #{tpu_custom_call.1} parent=47 // pred_fallthru
          _
        %s405 = sand.u32 %s41, 1
        %s406 = scalar_lea.sflag [#allocation3], %s405
        %s407 = sand.u32 %s41, 1
        %s408 = smul.addr %s407, 8
        %s409 = scalar_lea.vmem [#allocation2], %s408
        %p410 = pneg %p54
        %p411 = pneg %p51
        %p412 = pneg %p75
        %p413 = pneg %p72
        %p414 = pneg %p96
        %p415 = pneg %p93
        %p416 = pneg %p117
        %p417 = pneg %p114
        %p418 = pneg %p138
        %p419 = pneg %p135
        %p420 = pneg %p159
        %p421 = pneg %p156
        %p422 = pneg %p180
        %p423 = pneg %p177
        %p424 = pneg %p206
        %p425 = pneg %p203
        %s426 = sand.u32 %s193, 1
        %s427 = scalar_lea.sflag [#allocation4], %s426
        %s428 = sand.u32 %s193, 1
        %s429 = smul.addr %s428, 8
        %s430 = scalar_lea.vmem [#allocation14], %s429
        %p431 = pneg %p232
        %p432 = pneg %p229
        %s433 = sand.u32 %s33, 1
        %s434 = scalar_lea.sflag [#allocation16], %s433
        %s435 = sand.u32 %s219, 1
        %s436 = smul.addr %s435, 8
        %s437 = scalar_lea.vmem [#allocation15], %s436
        %p438 = pneg %p258
        %p439 = pneg %p255
        %s440 = sand.u32 %s33, 1
        %s441 = scalar_lea.sflag [#allocation16], %s440
        %s442 = sand.u32 %s245, 1
        %s443 = smul.addr %s442, 8
        %s444 = scalar_lea.vmem [#allocation17], %s443
        %v446 = vld [vmem:[%s376] sm:$0xff]
        %v447 = vld [vmem:[#allocation5] sm:$0xf]
        %v448 = vld [vmem:[#allocation5 + $0x4] sm:$0xf]
        %v449 = vld [vmem:[#allocation5 + $0x8] sm:$0xf]
        %v450 = vld [vmem:[#allocation5 + $0xc] sm:$0xf]
        %v451 = vpack.c.bf16 %v446, %v446
        %v452 = vld [vmem:[#allocation7] sm:$0x1]
        %v454 = vlaneseq
        %v455 = vshrl.u32 %v454, 7
        %v456 = vsub.s32 0, %v455
        %v457 = vrot.slane %v452, %v456
        %v463 = vunpack.c.l.b16 %v447
        %v464 = vunpack.c.l.b16 %v448
        %v465 = vunpack.c.l.b16 %v449
        %v466 = vunpack.c.l.b16 %v450
        %v467 = vpack.c.b16 %v464, %v463
        %v468 = vpack.c.b16 %v466, %v465
        %vm471 = vcmask 261120
        %v473 = vsel %vm471, %v451, 0
        %475 = vmatprep.subr.bf16.mxu0 0
        %476 = vmatpush1.bf16.msra.mxu0 %v467
        %477 = vmatprep.subr.bf16.mxu0 0
        %478 = vmatpush1.bf16.msra.mxu0 %v468
        %479 = vmatprep.subr.bf16.mxu0 0
        %480 = vmatpush1.bf16.msra.mxu0 0
        %481 = vmatprep.subr.bf16.mxu0 0
        %482 = vmatpush1.bf16.msra.mxu0 0
        %483 = vmatprep.subr.bf16.mxu0 0
        %484 = vmatpush1.bf16.msra.mxu0 0
        %485 = vmatprep.subr.bf16.mxu0 0
        %486 = vmatpush1.bf16.msra.mxu0 0
        %487 = vmatprep.subr.bf16.mxu0 0
        %488 = vmatpush1.bf16.msra.mxu0 0
        %489 = vmatprep.subr.bf16.mxu0 0
        %490 = vmatpush1.bf16.msra.mxu0 0
        %491 = vmatprep.subr.bf16.mxu0 0
        %492 = vmatpush1.bf16.msra.mxu0 0
        %493 = vmatprep.subr.bf16.mxu0 0
        %494 = vmatpush1.bf16.msra.mxu0 0
        %495 = vmatprep.subr.bf16.mxu0 0
        %496 = vmatpush1.bf16.msra.mxu0 0
        %497 = vmatprep.subr.bf16.mxu0 0
        %498 = vmatpush1.bf16.msra.mxu0 0
        %499 = vmatprep.subr.bf16.mxu0 0
        %500 = vmatpush1.bf16.msra.mxu0 0
        %501 = vmatprep.subr.bf16.mxu0 0
        %502 = vmatpush1.bf16.msra.mxu0 0
        %503 = vmatprep.subr.bf16.mxu0 0
        %504 = vmatpush1.bf16.msra.mxu0 0
        %505 = vmatprep.subr.bf16.mxu0 0
        %506 = vmatpush1.bf16.msra.mxu0 0
        %507 = vmatprep.mubr.bf16.mxu0 0
        %508 = vmatmul.mubr.bf16.gmra.mrb[0].mxu0 %v473
        %v509 = vpop.f32.mrb[0].mxu0
        %v510 = vadd.f32 %v457, %v509
        %v511 = vpop.f32.mrb[0].mxu0
        %v512 = vpop.f32.mrb[0].mxu0
        %v513 = vpop.f32.mrb[0].mxu0
        %514 = vdwg.mxu0
        %516 = vrot.lane.b32.xlu0 %v510, 96
        %v517 = vpop.permute.xlu0 %516
        %519 = vst.msk [vmem:[%s437] sm:$0xff] %vm471, %v517
        %520 = vrot.lane.b32.xlu0 %v510, 64
        %v521 = vpop.permute.xlu0 %520
        %523 = vst.msk [vmem:[%s444] sm:$0xff] %vm471, %v521
        %v524 = vlaneseq
        %v525 = vshrl.u32 %v524, 7
        %v526 = vlaneseq
        %v527 = vand.u32 %v526, 127
        %vm528 = vcmp.gt.s32.totalorder %v527, %v525
        %v529 = vsel %vm528, -1e+30, 0.0
        %v530 = vpack.c.bf16 %v510, %v510
        %532 = vrot.lane.b32.xlu0 %v530, 96
        %v533 = vpop.permute.xlu0 %532
        %vm534 = vcmask 64512
        %v536 = vsel %vm534, %v530, 0
        %v539 = vsel %vm534, %v533, 0
        %541 = vmatprep.subr.bf16.mxu0 0
        %542 = vmatpush1.bf16.xpose.msra.mxu0 %v539
        %543 = vmatprep.subr.bf16.mxu0 0
        %544 = vmatpush1.bf16.xpose.msra.mxu0 0
        %545 = vmatprep.subr.bf16.mxu0 0
        %546 = vmatpush1.bf16.xpose.msra.mxu0 0
        %547 = vmatprep.subr.bf16.mxu0 0
        %548 = vmatpush1.bf16.xpose.msra.mxu0 0
        %549 = vmatprep.subr.bf16.mxu0 0
        %550 = vmatpush1.bf16.xpose.msra.mxu0 0
        %551 = vmatprep.subr.bf16.mxu0 0
        %552 = vmatpush1.bf16.xpose.msra.mxu0 0
        %553 = vmatprep.subr.bf16.mxu0 0
        %554 = vmatpush1.bf16.xpose.msra.mxu0 0
        %555 = vmatprep.subr.bf16.mxu0 0
        %556 = vmatpush1.bf16.xpose.msra.mxu0 0
        %557 = vmatprep.subr.bf16.mxu0 0
        %558 = vmatpush1.bf16.xpose.msra.mxu0 0
        %559 = vmatprep.subr.bf16.mxu0 0
        %560 = vmatpush1.bf16.xpose.msra.mxu0 0
        %561 = vmatprep.subr.bf16.mxu0 0
        %562 = vmatpush1.bf16.xpose.msra.mxu0 0
        %563 = vmatprep.subr.bf16.mxu0 0
        %564 = vmatpush1.bf16.xpose.msra.mxu0 0
        %565 = vmatprep.subr.bf16.mxu0 0
        %566 = vmatpush1.bf16.xpose.msra.mxu0 0
        %567 = vmatprep.subr.bf16.mxu0 0
        %568 = vmatpush1.bf16.xpose.msra.mxu0 0
        %569 = vmatprep.subr.bf16.mxu0 0
        %570 = vmatpush1.bf16.xpose.msra.mxu0 0
        %571 = vmatprep.subr.bf16.mxu0 0
        %572 = vmatpush1.bf16.xpose.msra.mxu0 0
        %573 = vmatprep.mubr.bf16.mxu0 0
        %574 = vmatmul.mubr.bf16.gmra.mrb[0].mxu0 %v536
        %v575 = vpop.f32.mrb[0].mxu0
        %v576 = vadd.f32 %v529, %v575
        %v577 = vpop.f32.mrb[0].mxu0
        %v578 = vpop.f32.mrb[0].mxu0
        %v579 = vpop.f32.mrb[0].mxu0
        %580 = vdwg.mxu0
        %v581 = vsel %vm534, %v576, -inf
        %582 = vmax.xlane.f32.xlu0 %v581
        %v583 = vpop.xlane.xlu0 %582
        %v584 = vsub.f32 %v576, %v583
        %v585 = vmul.f32 %v584, 1.442695
        %v586 = vpow.pop %v585
        %v587 = vsel %vm534, %v586, 0.0
        %588 = vadd.xlane.f32.xlu0 %v587
        %v589 = vpop.xlane.xlu0 %588
        %v590 = vmax.f32 %v589, 1e-30
        %v591 = vrcp.pop %v590
        %v592 = vmul.f32 %v586, %v591
        %v593 = vpack.c.bf16 %v592, %v592
        %594 = vrot.lane.b32.xlu0 %v530, 64
        %v595 = vpop.permute.xlu0 %594
        %v597 = vsel %vm534, %v593, 0
        %vm599 = vcmask 1043456
        %v601 = vsel %vm599, %v595, 0
        %603 = vmatprep.subr.bf16.mxu0 0
        %604 = vmatpush1.bf16.msra.mxu0 %v601
        %605 = vmatprep.subr.bf16.mxu0 0
        %606 = vmatpush1.bf16.msra.mxu0 0
        %607 = vmatprep.subr.bf16.mxu0 0
        %608 = vmatpush1.bf16.msra.mxu0 0
        %609 = vmatprep.subr.bf16.mxu0 0
        %610 = vmatpush1.bf16.msra.mxu0 0
        %611 = vmatprep.subr.bf16.mxu0 0
        %612 = vmatpush1.bf16.msra.mxu0 0
        %613 = vmatprep.subr.bf16.mxu0 0
        %614 = vmatpush1.bf16.msra.mxu0 0
        %615 = vmatprep.subr.bf16.mxu0 0
        %616 = vmatpush1.bf16.msra.mxu0 0
        %617 = vmatprep.subr.bf16.mxu0 0
        %618 = vmatpush1.bf16.msra.mxu0 0
        %619 = vmatprep.subr.bf16.mxu0 0
        %620 = vmatpush1.bf16.msra.mxu0 0
        %621 = vmatprep.subr.bf16.mxu0 0
        %622 = vmatpush1.bf16.msra.mxu0 0
        %623 = vmatprep.subr.bf16.mxu0 0
        %624 = vmatpush1.bf16.msra.mxu0 0
        %625 = vmatprep.subr.bf16.mxu0 0
        %626 = vmatpush1.bf16.msra.mxu0 0
        %627 = vmatprep.subr.bf16.mxu0 0
        %628 = vmatpush1.bf16.msra.mxu0 0
        %629 = vmatprep.subr.bf16.mxu0 0
        %630 = vmatpush1.bf16.msra.mxu0 0
        %631 = vmatprep.subr.bf16.mxu0 0
        %632 = vmatpush1.bf16.msra.mxu0 0
        %633 = vmatprep.subr.bf16.mxu0 0
        %634 = vmatpush1.bf16.msra.mxu0 0
        %635 = vmatprep.mubr.bf16.mxu0 0
        %636 = vmatmul.mubr.bf16.gmra.mrb[0].mxu0 %v597
        %v637 = vpop.f32.mrb[0].mxu0
        %v638 = vadd.f32 0.0, %v637
        %v639 = vpop.f32.mrb[0].mxu0
        %v640 = vpop.f32.mrb[0].mxu0
        %v641 = vpop.f32.mrb[0].mxu0
        %642 = vdwg.mxu0
        %643 = vrot.lane.b32.xlu0 %v530, 120
        %v644 = vpop.permute.xlu0 %643
        %645 = vrot.lane.b32.xlu0 %v530, 88
        %v646 = vpop.permute.xlu0 %645
        %v648 = vsel %vm534, %v644, 0
        %v651 = vsel %vm534, %v646, 0
        %653 = vmatprep.subr.bf16.mxu0 0
        %654 = vmatpush1.bf16.xpose.msra.mxu0 %v651
        %655 = vmatprep.subr.bf16.mxu0 0
        %656 = vmatpush1.bf16.xpose.msra.mxu0 0
        %657 = vmatprep.subr.bf16.mxu0 0
        %658 = vmatpush1.bf16.xpose.msra.mxu0 0
        %659 = vmatprep.subr.bf16.mxu0 0
        %660 = vmatpush1.bf16.xpose.msra.mxu0 0
        %661 = vmatprep.subr.bf16.mxu0 0
        %662 = vmatpush1.bf16.xpose.msra.mxu0 0
        %663 = vmatprep.subr.bf16.mxu0 0
        %664 = vmatpush1.bf16.xpose.msra.mxu0 0
        %665 = vmatprep.subr.bf16.mxu0 0
        %666 = vmatpush1.bf16.xpose.msra.mxu0 0
        %667 = vmatprep.subr.bf16.mxu0 0
        %668 = vmatpush1.bf16.xpose.msra.mxu0 0
        %669 = vmatprep.subr.bf16.mxu0 0
        %670 = vmatpush1.bf16.xpose.msra.mxu0 0
        %671 = vmatprep.subr.bf16.mxu0 0
        %672 = vmatpush1.bf16.xpose.msra.mxu0 0
        %673 = vmatprep.subr.bf16.mxu0 0
        %674 = vmatpush1.bf16.xpose.msra.mxu0 0
        %675 = vmatprep.subr.bf16.mxu0 0
        %676 = vmatpush1.bf16.xpose.msra.mxu0 0
        %677 = vmatprep.subr.bf16.mxu0 0
        %678 = vmatpush1.bf16.xpose.msra.mxu0 0
        %679 = vmatprep.subr.bf16.mxu0 0
        %680 = vmatpush1.bf16.xpose.msra.mxu0 0
        %681 = vmatprep.subr.bf16.mxu0 0
        %682 = vmatpush1.bf16.xpose.msra.mxu0 0
        %683 = vmatprep.subr.bf16.mxu0 0
        %684 = vmatpush1.bf16.xpose.msra.mxu0 0
        %685 = vmatprep.mubr.bf16.mxu0 0
        %686 = vmatmul.mubr.bf16.gmra.mrb[0].mxu0 %v648
        %v687 = vpop.f32.mrb[0].mxu0
        %v688 = vadd.f32 %v529, %v687
        %v689 = vpop.f32.mrb[0].mxu0
        %v690 = vpop.f32.mrb[0].mxu0
        %v691 = vpop.f32.mrb[0].mxu0
        %692 = vdwg.mxu0
        %v693 = vsel %vm534, %v688, -inf
        %694 = vmax.xlane.f32.xlu0 %v693
        %v695 = vpop.xlane.xlu0 %694
        %v696 = vsub.f32 %v688, %v695
        %v697 = vmul.f32 %v696, 1.442695
        %v698 = vpow.pop %v697
        %v699 = vsel %vm534, %v698, 0.0
        %700 = vadd.xlane.f32.xlu0 %v699
        %v701 = vpop.xlane.xlu0 %700
        %v702 = vmax.f32 %v701, 1e-30
        %v703 = vrcp.pop %v702
        %v704 = vmul.f32 %v698, %v703
        %v705 = vpack.c.bf16 %v704, %v704
        %706 = vrot.lane.b32.xlu0 %v530, 56
        %v707 = vpop.permute.xlu0 %706
        %v709 = vsel %vm534, %v705, 0
        %v712 = vsel %vm599, %v707, 0
        %714 = vmatprep.subr.bf16.mxu0 0
        %715 = vmatpush1.bf16.msra.mxu0 %v712
        %716 = vmatprep.subr.bf16.mxu0 0
        %717 = vmatpush1.bf16.msra.mxu0 0
        %718 = vmatprep.subr.bf16.mxu0 0
        %719 = vmatpush1.bf16.msra.mxu0 0
        %720 = vmatprep.subr.bf16.mxu0 0
        %721 = vmatpush1.bf16.msra.mxu0 0
        %722 = vmatprep.subr.bf16.mxu0 0
        %723 = vmatpush1.bf16.msra.mxu0 0
        %724 = vmatprep.subr.bf16.mxu0 0
        %725 = vmatpush1.bf16.msra.mxu0 0
        %726 = vmatprep.subr.bf16.mxu0 0
        %727 = vmatpush1.bf16.msra.mxu0 0
        %728 = vmatprep.subr.bf16.mxu0 0
        %729 = vmatpush1.bf16.msra.mxu0 0
        %730 = vmatprep.subr.bf16.mxu0 0
        %731 = vmatpush1.bf16.msra.mxu0 0
        %732 = vmatprep.subr.bf16.mxu0 0
        %733 = vmatpush1.bf16.msra.mxu0 0
        %734 = vmatprep.subr.bf16.mxu0 0
        %735 = vmatpush1.bf16.msra.mxu0 0
        %736 = vmatprep.subr.bf16.mxu0 0
        %737 = vmatpush1.bf16.msra.mxu0 0
        %738 = vmatprep.subr.bf16.mxu0 0
        %739 = vmatpush1.bf16.msra.mxu0 0
        %740 = vmatprep.subr.bf16.mxu0 0
        %741 = vmatpush1.bf16.msra.mxu0 0
        %742 = vmatprep.subr.bf16.mxu0 0
        %743 = vmatpush1.bf16.msra.mxu0 0
        %744 = vmatprep.subr.bf16.mxu0 0
        %745 = vmatpush1.bf16.msra.mxu0 0
        %746 = vmatprep.mubr.bf16.mxu0 0
        %747 = vmatmul.mubr.bf16.gmra.mrb[0].mxu0 %v709
        %v748 = vpop.f32.mrb[0].mxu0
        %v749 = vadd.f32 0.0, %v748
        %v750 = vpop.f32.mrb[0].mxu0
        %v751 = vpop.f32.mrb[0].mxu0
        %v752 = vpop.f32.mrb[0].mxu0
        %753 = vdwg.mxu0
        %754 = vrot.lane.b32.xlu0 %v530, 112
        %v755 = vpop.permute.xlu0 %754
        %756 = vrot.lane.b32.xlu0 %v530, 80
        %v757 = vpop.permute.xlu0 %756
        %v759 = vsel %vm534, %v755, 0
        %v762 = vsel %vm534, %v757, 0
        %764 = vmatprep.subr.bf16.mxu0 0
        %765 = vmatpush1.bf16.xpose.msra.mxu0 %v762
        %766 = vmatprep.subr.bf16.mxu0 0
        %767 = vmatpush1.bf16.xpose.msra.mxu0 0
        %768 = vmatprep.subr.bf16.mxu0 0
        %769 = vmatpush1.bf16.xpose.msra.mxu0 0
        %770 = vmatprep.subr.bf16.mxu0 0
        %771 = vmatpush1.bf16.xpose.msra.mxu0 0
        %772 = vmatprep.subr.bf16.mxu0 0
        %773 = vmatpush1.bf16.xpose.msra.mxu0 0
        %774 = vmatprep.subr.bf16.mxu0 0
        %775 = vmatpush1.bf16.xpose.msra.mxu0 0
        %776 = vmatprep.subr.bf16.mxu0 0
        %777 = vmatpush1.bf16.xpose.msra.mxu0 0
        %778 = vmatprep.subr.bf16.mxu0 0
        %779 = vmatpush1.bf16.xpose.msra.mxu0 0
        %780 = vmatprep.subr.bf16.mxu0 0
        %781 = vmatpush1.bf16.xpose.msra.mxu0 0
        %782 = vmatprep.subr.bf16.mxu0 0
        %783 = vmatpush1.bf16.xpose.msra.mxu0 0
        %784 = vmatprep.subr.bf16.mxu0 0
        %785 = vmatpush1.bf16.xpose.msra.mxu0 0
        %786 = vmatprep.subr.bf16.mxu0 0
        %787 = vmatpush1.bf16.xpose.msra.mxu0 0
        %788 = vmatprep.subr.bf16.mxu0 0
        %789 = vmatpush1.bf16.xpose.msra.mxu0 0
        %790 = vmatprep.subr.bf16.mxu0 0
        %791 = vmatpush1.bf16.xpose.msra.mxu0 0
        %792 = vmatprep.subr.bf16.mxu0 0
        %793 = vmatpush1.bf16.xpose.msra.mxu0 0
        %794 = vmatprep.subr.bf16.mxu0 0
        %795 = vmatpush1.bf16.xpose.msra.mxu0 0
        %796 = vmatprep.mubr.bf16.mxu0 0
        %797 = vmatmul.mubr.bf16.gmra.mrb[0].mxu0 %v759
        %v798 = vpop.f32.mrb[0].mxu0
        %v799 = vadd.f32 %v529, %v798
        %v800 = vpop.f32.mrb[0].mxu0
        %v801 = vpop.f32.mrb[0].mxu0
        %v802 = vpop.f32.mrb[0].mxu0
        %803 = vdwg.mxu0
        %v804 = vsel %vm534, %v799, -inf
        %805 = vmax.xlane.f32.xlu0 %v804
        %v806 = vpop.xlane.xlu0 %805
        %v807 = vsub.f32 %v799, %v806
        %v808 = vmul.f32 %v807, 1.442695
        %v809 = vpow.pop %v808
        %v810 = vsel %vm534, %v809, 0.0
        %811 = vadd.xlane.f32.xlu0 %v810
        %v812 = vpop.xlane.xlu0 %811
        %v813 = vmax.f32 %v812, 1e-30
        %v814 = vrcp.pop %v813
        %v815 = vmul.f32 %v809, %v814
        %v816 = vpack.c.bf16 %v815, %v815
        %817 = vrot.lane.b32.xlu0 %v530, 48
        %v818 = vpop.permute.xlu0 %817
        %v820 = vsel %vm534, %v816, 0
        %v823 = vsel %vm599, %v818, 0
        %825 = vmatprep.subr.bf16.mxu0 0
        %826 = vmatpush1.bf16.msra.mxu0 %v823
        %827 = vmatprep.subr.bf16.mxu0 0
        %828 = vmatpush1.bf16.msra.mxu0 0
        %829 = vmatprep.subr.bf16.mxu0 0
        %830 = vmatpush1.bf16.msra.mxu0 0
        %831 = vmatprep.subr.bf16.mxu0 0
        %832 = vmatpush1.bf16.msra.mxu0 0
        %833 = vmatprep.subr.bf16.mxu0 0
        %834 = vmatpush1.bf16.msra.mxu0 0
        %835 = vmatprep.subr.bf16.mxu0 0
        %836 = vmatpush1.bf16.msra.mxu0 0
        %837 = vmatprep.subr.bf16.mxu0 0
        %838 = vmatpush1.bf16.msra.mxu0 0
        %839 = vmatprep.subr.bf16.mxu0 0
        %840 = vmatpush1.bf16.msra.mxu0 0
        %841 = vmatprep.subr.bf16.mxu0 0
        %842 = vmatpush1.bf16.msra.mxu0 0
        %843 = vmatprep.subr.bf16.mxu0 0
        %844 = vmatpush1.bf16.msra.mxu0 0
        %845 = vmatprep.subr.bf16.mxu0 0
        %846 = vmatpush1.bf16.msra.mxu0 0
        %847 = vmatprep.subr.bf16.mxu0 0
        %848 = vmatpush1.bf16.msra.mxu0 0
        %849 = vmatprep.subr.bf16.mxu0 0
        %850 = vmatpush1.bf16.msra.mxu0 0
        %851 = vmatprep.subr.bf16.mxu0 0
        %852 = vmatpush1.bf16.msra.mxu0 0
        %853 = vmatprep.subr.bf16.mxu0 0
        %854 = vmatpush1.bf16.msra.mxu0 0
        %855 = vmatprep.subr.bf16.mxu0 0
        %856 = vmatpush1.bf16.msra.mxu0 0
        %857 = vmatprep.mubr.bf16.mxu0 0
        %858 = vmatmul.mubr.bf16.gmra.mrb[0].mxu0 %v820
        %v859 = vpop.f32.mrb[0].mxu0
        %v860 = vadd.f32 0.0, %v859
        %v861 = vpop.f32.mrb[0].mxu0
        %v862 = vpop.f32.mrb[0].mxu0
        %v863 = vpop.f32.mrb[0].mxu0
        %864 = vdwg.mxu0
        %865 = vrot.lane.b32.xlu0 %v530, 104
        %v866 = vpop.permute.xlu0 %865
        %867 = vrot.lane.b32.xlu0 %v530, 72
        %v868 = vpop.permute.xlu0 %867
        %v870 = vsel %vm534, %v866, 0
        %v873 = vsel %vm534, %v868, 0
        %875 = vmatprep.subr.bf16.mxu0 0
        %876 = vmatpush1.bf16.xpose.msra.mxu0 %v873
        %877 = vmatprep.subr.bf16.mxu0 0
        %878 = vmatpush1.bf16.xpose.msra.mxu0 0
        %879 = vmatprep.subr.bf16.mxu0 0
        %880 = vmatpush1.bf16.xpose.msra.mxu0 0
        %881 = vmatprep.subr.bf16.mxu0 0
        %882 = vmatpush1.bf16.xpose.msra.mxu0 0
        %883 = vmatprep.subr.bf16.mxu0 0
        %884 = vmatpush1.bf16.xpose.msra.mxu0 0
        %885 = vmatprep.subr.bf16.mxu0 0
        %886 = vmatpush1.bf16.xpose.msra.mxu0 0
        %887 = vmatprep.subr.bf16.mxu0 0
        %888 = vmatpush1.bf16.xpose.msra.mxu0 0
        %889 = vmatprep.subr.bf16.mxu0 0
        %890 = vmatpush1.bf16.xpose.msra.mxu0 0
        %891 = vmatprep.subr.bf16.mxu0 0
        %892 = vmatpush1.bf16.xpose.msra.mxu0 0
        %893 = vmatprep.subr.bf16.mxu0 0
        %894 = vmatpush1.bf16.xpose.msra.mxu0 0
        %895 = vmatprep.subr.bf16.mxu0 0
        %896 = vmatpush1.bf16.xpose.msra.mxu0 0
        %897 = vmatprep.subr.bf16.mxu0 0
        %898 = vmatpush1.bf16.xpose.msra.mxu0 0
        %899 = vmatprep.subr.bf16.mxu0 0
        %900 = vmatpush1.bf16.xpose.msra.mxu0 0
        %901 = vmatprep.subr.bf16.mxu0 0
        %902 = vmatpush1.bf16.xpose.msra.mxu0 0
        %903 = vmatprep.subr.bf16.mxu0 0
        %904 = vmatpush1.bf16.xpose.msra.mxu0 0
        %905 = vmatprep.subr.bf16.mxu0 0
        %906 = vmatpush1.bf16.xpose.msra.mxu0 0
        %907 = vmatprep.mubr.bf16.mxu0 0
        %908 = vmatmul.mubr.bf16.gmra.mrb[0].mxu0 %v870
        %v909 = vpop.f32.mrb[0].mxu0
        %v910 = vadd.f32 %v529, %v909
        %v911 = vpop.f32.mrb[0].mxu0
        %v912 = vpop.f32.mrb[0].mxu0
        %v913 = vpop.f32.mrb[0].mxu0
        %914 = vdwg.mxu0
        %v915 = vsel %vm534, %v910, -inf
        %916 = vmax.xlane.f32.xlu0 %v915
        %v917 = vpop.xlane.xlu0 %916
        %v918 = vsub.f32 %v910, %v917
        %v919 = vmul.f32 %v918, 1.442695
        %v920 = vpow.pop %v919
        %v921 = vsel %vm534, %v920, 0.0
        %922 = vadd.xlane.f32.xlu0 %v921
        %v923 = vpop.xlane.xlu0 %922
        %v924 = vmax.f32 %v923, 1e-30
        %v925 = vrcp.pop %v924
        %v926 = vmul.f32 %v920, %v925
        %v927 = vpack.c.bf16 %v926, %v926
        %928 = vrot.lane.b32.xlu0 %v530, 40
        %v929 = vpop.permute.xlu0 %928
        %v931 = vsel %vm534, %v927, 0
        %v934 = vsel %vm599, %v929, 0
        %936 = vmatprep.subr.bf16.mxu0 0
        %937 = vmatpush1.bf16.msra.mxu0 %v934
        %938 = vmatprep.subr.bf16.mxu0 0
        %939 = vmatpush1.bf16.msra.mxu0 0
        %940 = vmatprep.subr.bf16.mxu0 0
        %941 = vmatpush1.bf16.msra.mxu0 0
        %942 = vmatprep.subr.bf16.mxu0 0
        %943 = vmatpush1.bf16.msra.mxu0 0
        %944 = vmatprep.subr.bf16.mxu0 0
        %945 = vmatpush1.bf16.msra.mxu0 0
        %946 = vmatprep.subr.bf16.mxu0 0
        %947 = vmatpush1.bf16.msra.mxu0 0
        %948 = vmatprep.subr.bf16.mxu0 0
        %949 = vmatpush1.bf16.msra.mxu0 0
        %950 = vmatprep.subr.bf16.mxu0 0
        %951 = vmatpush1.bf16.msra.mxu0 0
        %952 = vmatprep.subr.bf16.mxu0 0
        %953 = vmatpush1.bf16.msra.mxu0 0
        %954 = vmatprep.subr.bf16.mxu0 0
        %955 = vmatpush1.bf16.msra.mxu0 0
        %956 = vmatprep.subr.bf16.mxu0 0
        %957 = vmatpush1.bf16.msra.mxu0 0
        %958 = vmatprep.subr.bf16.mxu0 0
        %959 = vmatpush1.bf16.msra.mxu0 0
        %960 = vmatprep.subr.bf16.mxu0 0
        %961 = vmatpush1.bf16.msra.mxu0 0
        %962 = vmatprep.subr.bf16.mxu0 0
        %963 = vmatpush1.bf16.msra.mxu0 0
        %964 = vmatprep.subr.bf16.mxu0 0
        %965 = vmatpush1.bf16.msra.mxu0 0
        %966 = vmatprep.subr.bf16.mxu0 0
        %967 = vmatpush1.bf16.msra.mxu0 0
        %968 = vmatprep.mubr.bf16.mxu0 0
        %969 = vmatmul.mubr.bf16.gmra.mrb[0].mxu0 %v931
        %v970 = vpop.f32.mrb[0].mxu0
        %v971 = vadd.f32 0.0, %v970
        %v972 = vpop.f32.mrb[0].mxu0
        %v973 = vpop.f32.mrb[0].mxu0
        %v974 = vpop.f32.mrb[0].mxu0
        %975 = vdwg.mxu0
        %977 = vrot.lane.b32.xlu0 %v749, 8
        %v978 = vpop.permute.xlu0 %977
        %981 = vrot.lane.b32.xlu0 %v860, 16
        %v982 = vpop.permute.xlu0 %981
        %985 = vrot.lane.b32.xlu0 %v971, 24
        %v986 = vpop.permute.xlu0 %985
        %v988 = vsel %vm534, %v638, %v978
        %vm989 = vcmask 130048
        %v990 = vsel %vm989, %v988, %v982
        %vm991 = vcmask 195584
        %v992 = vsel %vm991, %v990, %v986
        %v993 = vld [vmem:[#allocation8] sm:$0xf]
        %v994 = vld [vmem:[#allocation8 + $0x4] sm:$0xf]
        %v995 = vld [vmem:[#allocation8 + $0x8] sm:$0xf]
        %v996 = vld [vmem:[#allocation8 + $0xc] sm:$0xf]
        %v997 = vpack.c.bf16 %v992, %v992
        %v998 = vld [vmem:[#allocation10] sm:$0x1]
        %v1000 = vlaneseq
        %v1001 = vshrl.u32 %v1000, 7
        %v1002 = vsub.s32 0, %v1001
        %v1003 = vrot.slane %v998, %v1002
        %v1009 = vunpack.c.l.b16 %v993
        %v1010 = vunpack.c.l.b16 %v994
        %v1011 = vunpack.c.l.b16 %v995
        %v1012 = vunpack.c.l.b16 %v996
        %v1013 = vpack.c.b16 %v1010, %v1009
        %v1014 = vpack.c.b16 %v1012, %v1011
        %v1018 = vsel %vm471, %v997, 0
        %1020 = vmatprep.subr.bf16.mxu0 0
        %1021 = vmatpush1.bf16.msra.mxu0 %v1013
        %1022 = vmatprep.subr.bf16.mxu0 0
        %1023 = vmatpush1.bf16.msra.mxu0 %v1014
        %1024 = vmatprep.subr.bf16.mxu0 0
        %1025 = vmatpush1.bf16.msra.mxu0 0
        %1026 = vmatprep.subr.bf16.mxu0 0
        %1027 = vmatpush1.bf16.msra.mxu0 0
        %1028 = vmatprep.subr.bf16.mxu0 0
        %1029 = vmatpush1.bf16.msra.mxu0 0
        %1030 = vmatprep.subr.bf16.mxu0 0
        %1031 = vmatpush1.bf16.msra.mxu0 0
        %1032 = vmatprep.subr.bf16.mxu0 0
        %1033 = vmatpush1.bf16.msra.mxu0 0
        %1034 = vmatprep.subr.bf16.mxu0 0
        %1035 = vmatpush1.bf16.msra.mxu0 0
        %1036 = vmatprep.subr.bf16.mxu0 0
        %1037 = vmatpush1.bf16.msra.mxu0 0
        %1038 = vmatprep.subr.bf16.mxu0 0
        %1039 = vmatpush1.bf16.msra.mxu0 0
        %1040 = vmatprep.subr.bf16.mxu0 0
        %1041 = vmatpush1.bf16.msra.mxu0 0
        %1042 = vmatprep.subr.bf16.mxu0 0
        %1043 = vmatpush1.bf16.msra.mxu0 0
        %1044 = vmatprep.subr.bf16.mxu0 0
        %1045 = vmatpush1.bf16.msra.mxu0 0
        %1046 = vmatprep.subr.bf16.mxu0 0
        %1047 = vmatpush1.bf16.msra.mxu0 0
        %1048 = vmatprep.subr.bf16.mxu0 0
        %1049 = vmatpush1.bf16.msra.mxu0 0
        %1050 = vmatprep.subr.bf16.mxu0 0
        %1051 = vmatpush1.bf16.msra.mxu0 0
        %1052 = vmatprep.mubr.bf16.mxu0 0
        %1053 = vmatmul.mubr.bf16.gmra.mrb[0].mxu0 %v1018
        %v1054 = vpop.f32.mrb[0].mxu0
        %v1055 = vadd.f32 %v1003, %v1054
        %v1056 = vpop.f32.mrb[0].mxu0
        %v1057 = vpop.f32.mrb[0].mxu0
        %v1058 = vpop.f32.mrb[0].mxu0
        %1059 = vdwg.mxu0
        %v1060 = vadd.f32 %v446, %v1055
        %v1061 = vld [vmem:[#allocation11] sm:$0x1]
        %v1062 = vld [vmem:[#allocation13] sm:$0x1]
        %v1063 = vsel %vm471, %v1060, 0.0
        %1064 = vadd.xlane.f32.xlu0 %v1063
        %v1065 = vpop.xlane.xlu0 %1064
        %v1066 = vrcp.pop 32.0
        %v1067 = vmul.f32 %v1065, %v1066
        %v1068 = vmul.f32 %v1060, %v1060
        %v1069 = vsel %vm471, %v1068, 0.0
        %1070 = vadd.xlane.f32.xlu0 %v1069
        %v1071 = vpop.xlane.xlu0 %1070
        %v1072 = vmul.f32 %v1071, %v1066
        %v1073 = vmul.f32 %v1067, %v1067
        %v1074 = vsub.f32 %v1072, %v1073
        %v1075 = vmax.f32 %v1074, 0.0
        %v1076 = vsub.f32 %v1060, %v1067
        %v1077 = vadd.f32 %v1075, 1e-05
        %v1078 = vrsqrt.pop %v1077
        %v1079 = vmul.f32 %v1076, %v1078
        %v1081 = vlaneseq
        %v1082 = vshrl.u32 %v1081, 7
        %v1083 = vsub.s32 0, %v1082
        %v1084 = vrot.slane %v1061, %v1083
        %v1086 = vmul.f32 %v1079, %v1084
        %v1088 = vlaneseq
        %v1089 = vshrl.u32 %v1088, 7
        %v1090 = vsub.s32 0, %v1089
        %v1091 = vrot.slane %v1062, %v1090
        %v1093 = vadd.f32 %v1086, %v1091
        %1094 = vst.msk [vmem:[%s430] sm:$0xff] %vm471, %v1093
        %s1095 = sand.u32 %s193, 1
        %s1096 = scalar_lea.sflag [#allocation4], %s1095
        %s1097 = sand.u32 %s193, 1
        %s1098 = smul.addr %s1097, 8
        %s1099 = scalar_lea.vmem [#allocation14], %s1098
        %s1100 = sand.u32 %s33, 1
        %s1101 = scalar_lea.sflag [#allocation16], %s1100
        %s1102 = sand.u32 %s219, 1
        %s1103 = smul.addr %s1102, 8
        %s1104 = scalar_lea.vmem [#allocation15], %s1103
        %s1105 = sand.u32 %s33, 1
        %s1106 = scalar_lea.sflag [#allocation16], %s1105
        %s1107 = sand.u32 %s245, 1
        %s1108 = smul.addr %s1107, 8
        %s1109 = scalar_lea.vmem [#allocation17], %s1108
        // Predicated region
        $region77: #{tpu_custom_call.1} parent=47 // pred_check
          %p1110 = pneg %p203
        $region78: #{tpu_custom_call.1} parent=47 // pred_check_branch
          %1112 = sbr.rel (%p1110) target = $region80
        $region79: #{tpu_custom_call.1} parent=47 // pred_region
          %s1114 = ssub.s32 128, 128
          %1115 = vsyncadd %s1096, %s1114
          %s1116 = smul.addr %s33, 128
          %s1117 = scalar_lea.hbm %s7, %s1116
          %s1119 = sshll.u32 %s1099, 4
          %s1120 = int_to_ptr.vmem [resolvable:$true] %s1119
          %1122 = dma.vmem_to_hbm [thread:$0]  %s1120, 128, %s1117, %s1096
        $region80: #{tpu_custom_call.1} parent=47 // pred_fallthru
          _
        // Predicated region
        $region81: #{tpu_custom_call.1} parent=47 // pred_check
          %p1123 = pneg %p229
        $region82: #{tpu_custom_call.1} parent=47 // pred_check_branch
          %1125 = sbr.rel (%p1123) target = $region84
        $region83: #{tpu_custom_call.1} parent=47 // pred_region
          %s1127 = ssub.s32 128, 128
          %1128 = vsyncadd %s1101, %s1127
          %s1129 = smul.addr %s33, 128
          %s1130 = scalar_lea.hbm %s8, %s1129
          %s1132 = sshll.u32 %s1104, 4
          %s1133 = int_to_ptr.vmem [resolvable:$true] %s1132
          %1135 = dma.vmem_to_hbm [thread:$0]  %s1133, 128, %s1130, %s1101
        $region84: #{tpu_custom_call.1} parent=47 // pred_fallthru
          _
        // Predicated region
        $region85: #{tpu_custom_call.1} parent=47 // pred_check
          %p1136 = pneg %p255
        $region86: #{tpu_custom_call.1} parent=47 // pred_check_branch
          %1138 = sbr.rel (%p1136) target = $region88
        $region87: #{tpu_custom_call.1} parent=47 // pred_region
          %s1140 = ssub.s32 128, 128
          %1141 = vsyncadd %s1106, %s1140
          %s1142 = smul.addr %s33, 128
          %s1143 = scalar_lea.hbm %s9, %s1142
          %s1145 = sshll.u32 %s1109, 4
          %s1146 = int_to_ptr.vmem [resolvable:$true] %s1145
          %1148 = dma.vmem_to_hbm [thread:$0]  %s1146, 128, %s1143, %s1106
        $region88: #{tpu_custom_call.1} parent=47 // pred_fallthru
          _
      $region48: #{tpu_custom_call.1} parent=5 // pred_fallthru
        _
      %p1149 = scmp.le.s32.totalorder 2, %s28
      // Predicated region
      $region89: #{tpu_custom_call.1} parent=5 // pred_check
        %p1150 = pneg %p1149
      $region90: #{tpu_custom_call.1} parent=5 // pred_check_branch
        %1152 = sbr.rel (%p1150) target = $region92
      $region91: #{tpu_custom_call.1} parent=5 // pred_region
        %s1153 = ssub.s32 %s28, 2
        // Predicated region
        $region93: #{tpu_custom_call.1} parent=91 // pred_check
          %p1154 = pneg %p209
        $region94: #{tpu_custom_call.1} parent=91 // pred_check_branch
          %1156 = sbr.rel (%p1154) target = $region96
        $region95: #{tpu_custom_call.1} parent=91 // pred_region
          %s1157 = sand.u32 %s194, 1
          %s1158 = scalar_lea.sflag [#allocation4], %s1157
          %s1159 = sand.u32 %s194, 1
          %s1160 = smul.addr %s1159, 8
          %s1161 = scalar_lea.vmem [#allocation14], %s1160
          %1162 = dma.done %s1158, 128
        $region96: #{tpu_custom_call.1} parent=91 // pred_fallthru
          _
        // Predicated region
        $region97: #{tpu_custom_call.1} parent=91 // pred_check
          %p1163 = pneg %p235
        $region98: #{tpu_custom_call.1} parent=91 // pred_check_branch
          %1165 = sbr.rel (%p1163) target = $region100
        $region99: #{tpu_custom_call.1} parent=91 // pred_region
          %s1166 = sand.u32 %s34, 1
          %s1167 = scalar_lea.sflag [#allocation16], %s1166
          %s1168 = sand.u32 %s220, 1
          %s1169 = smul.addr %s1168, 8
          %s1170 = scalar_lea.vmem [#allocation15], %s1169
          %1171 = dma.done %s1167, 128
        $region100: #{tpu_custom_call.1} parent=91 // pred_fallthru
          _
        // Predicated region
        $region101: #{tpu_custom_call.1} parent=91 // pred_check
          %p1172 = pneg %p261
        $region102: #{tpu_custom_call.1} parent=91 // pred_check_branch
          %1174 = sbr.rel (%p1172) target = $region104
        $region103: #{tpu_custom_call.1} parent=91 // pred_region
          %s1175 = sand.u32 %s34, 1
          %s1176 = scalar_lea.sflag [#allocation16], %s1175
          %s1177 = sand.u32 %s246, 1
          %s1178 = smul.addr %s1177, 8
          %s1179 = scalar_lea.vmem [#allocation17], %s1178
          %1180 = dma.done %s1176, 128
        $region104: #{tpu_custom_call.1} parent=91 // pred_fallthru
          _
      $region92: #{tpu_custom_call.1} parent=5 // pred_fallthru
        _
    $region6: #{tpu_custom_call.1} parent=1 // loop_footer
      %s32 = sadd.s32 1, %s28
    $region7: #{tpu_custom_call.1} parent=1 // loop_footer_branch
      %27 = sbr.rel target = $region3
    $region8: #{tpu_custom_call.1} parent=1 // loop_exit
      _
    %1181 = vsyncpa [#allocation3], 1
    %s1182 = scalar_lea.sflag [#allocation3], 1
    %1183 = vsyncpa %s1182, 1
    %1184 = vsyncpa [#allocation6], 1
    %1185 = vsyncpa [#allocation9], 1
    %1186 = vsyncpa [#allocation12], 1
    %1187 = vsyncpa [#allocation4], 1
    %s1188 = scalar_lea.sflag [#allocation4], 1
    %1189 = vsyncpa %s1188, 1
    %1190 = vsyncpa [#allocation16], 1
    %s1191 = scalar_lea.sflag [#allocation16], 1
    %1192 = vsyncpa %s1191, 1

</llo_original>
